<compile_context>
chip_gen: v5e
topology: v5e:2x2
jax: 0.10.0
libtpu: 0.0.40
codegen_flags: <defaults>
</compile_context>

<pallas_src>
import functools
import math

import jax
import jax.numpy as jnp
from jax import lax
from jax.experimental import pallas as pl
from jax.experimental.pallas import tpu as pltpu


# -----------------------------------------------------------------------------
# Kernel
# -----------------------------------------------------------------------------
def encoder_kernel(x_ref, wqkv_ref, bqkv_ref, wo_ref, w1_ref, b1_ref, w2_ref,
                   vecd_ref, out_ref, *, h, q, v, chunk_size, ff_tile):
    """One row-tile of the flattened (B*K, d_model) sequence.

    x_ref    : (Rt, d_model)        fp32
    wqkv_ref : (d_model, 2hq+hv)    bf16   [Wq | Wk | Wv] columns, Wq pre-scaled
    bqkv_ref : (1, 2hq+hv)          fp32   [bq | bk | bv], bq pre-scaled
    wo_ref   : (h, v, d_model)      bf16   per-head output projection
    w1_ref   : (d_model, d_ff)      bf16
    b1_ref   : (1, d_ff)            fp32
    w2_ref   : (d_ff, d_model)      bf16
    vecd_ref : (6, d_model)         fp32   rows = [b_o, ln1_g, ln1_b, b2, ln2_g, ln2_b]
    out_ref  : (Rt, d_model)        fp32
    """
    x = x_ref[...]                                   # (Rt, d_model) fp32
    Rt, d_model = x.shape
    cs = chunk_size
    nc = Rt // cs                                    # chunks in this row tile
    hq = h * q
    hv = h * v
    d_ff = w1_ref.shape[1]

    xb = x.astype(jnp.bfloat16)
    vec = vecd_ref[...]                              # (6, d_model) fp32

    # ---- lane-dense fused Q/K/V projection: one MXU matmul, N = 2hq+hv ------
    qkv = jnp.dot(xb, wqkv_ref[...], preferred_element_type=jnp.float32)
    qkv = qkv + bqkv_ref[...]                        # (Rt, 2hq+hv)

    # Relayout once to the per-(head, chunk) batched attention layout using
    # only static lane slices + leading-dim reshapes/concats (lowering-safe).
    def chunk_heads(base, dim):
        pieces = [qkv[:, base + i * dim: base + (i + 1) * dim].reshape(nc, cs, dim)
                  for i in range(h)]
        return pieces[0] if h == 1 else jnp.concatenate(pieces, axis=0)

    Qb = chunk_heads(0, q).astype(jnp.bfloat16)        # (h*nc, cs, q) scale folded
    Kb = chunk_heads(hq, q).astype(jnp.bfloat16)       # (h*nc, cs, q)
    Vb = chunk_heads(2 * hq, v).astype(jnp.bfloat16)   # (h*nc, cs, v)

    # ---- chunk-local attention as batched MXU contractions, fp32 softmax ----
    s = jnp.einsum('bik,bjk->bij', Qb, Kb,
                   preferred_element_type=jnp.float32)           # (h*nc, cs, cs)
    s = s - jnp.max(s, axis=-1, keepdims=True)
    p = jnp.exp(s)
    # Approx reciprocal runs on the EUP (free slot); ~1e-3 relative error on
    # attention weights, far inside the test tolerance.  Use approx=False for
    # bit-closer parity with the fp32 reference if needed.
    p = p * pl.reciprocal(jnp.sum(p, axis=-1, keepdims=True), approx=True)
    a = jnp.einsum('bij,bjv->biv', p.astype(jnp.bfloat16), Vb,
                   preferred_element_type=jnp.float32)           # (h*nc, cs, v)

    # ---- output projection: head sum accumulated into one (Rt, d_model) -----
    sa = jnp.zeros((Rt, d_model), jnp.float32)
    for i in range(h):
        ai = a[i * nc:(i + 1) * nc].reshape(Rt, v).astype(jnp.bfloat16)
        sa = sa + jnp.dot(ai, wo_ref[i], preferred_element_type=jnp.float32)
    sa = sa + vec[0:1, :]                                        # + b_o

    # ---- residual + LayerNorm (fp32) -----------------------------------------
    def layer_norm(y, g, b, eps=1e-5):
        mu = jnp.mean(y, axis=-1, keepdims=True)
        var = jnp.mean((y - mu) ** 2, axis=-1, keepdims=True)
        return (y - mu) * lax.rsqrt(var + eps) * g + b

    x1 = layer_norm(sa + x, vec[1:2, :], vec[2:3, :])

    # ---- position-wise feed-forward, tiled over d_ff, + residual + LN --------
    x1b = x1.astype(jnp.bfloat16)
    ff = jnp.zeros((Rt, d_model), jnp.float32)
    for t in range(d_ff // ff_tile):
        lo, hi = t * ff_tile, (t + 1) * ff_tile
        hid = jnp.dot(x1b, w1_ref[:, lo:hi],
                      preferred_element_type=jnp.float32) + b1_ref[:, lo:hi]
        hid = jnp.maximum(hid, 0.0)
        ff = ff + jnp.dot(hid.astype(jnp.bfloat16), w2_ref[lo:hi, :],
                          preferred_element_type=jnp.float32)
    ff = ff + vec[3:4, :]                                        # + b2

    out_ref[...] = layer_norm(ff + x1, vec[4:5, :], vec[5:6, :])


# -----------------------------------------------------------------------------
# Parameter packing (done once, outside the kernel)
# -----------------------------------------------------------------------------
def _pack_params(rp, *, h, q, v, chunk_size):
    d_model = rp['wq'].shape[0]
    scale = 1.0 / math.sqrt(chunk_size)              # fold score scaling into Wq/bq
    wqkv = jnp.concatenate([rp['wq'] * scale, rp['wk'], rp['wv']],
                           axis=1).astype(jnp.bfloat16)          # (d, 2hq+hv)
    bqkv = jnp.concatenate([rp['bq'] * scale, rp['bk'], rp['bv']],
                           axis=0).reshape(1, -1).astype(jnp.float32)
    wo = rp['wo'].reshape(h, v, d_model).astype(jnp.bfloat16)    # head-major rows
    w1 = rp['w1'].astype(jnp.bfloat16)
    b1 = rp['b1'].reshape(1, -1).astype(jnp.float32)
    w2 = rp['w2'].astype(jnp.bfloat16)
    vecd = jnp.stack([rp['bo'], rp['ln1_g'], rp['ln1_b'],
                      rp['b2'], rp['ln2_g'], rp['ln2_b']],
                     axis=0).astype(jnp.float32)
    return wqkv, bqkv, wo, w1, b1, w2, vecd


# -----------------------------------------------------------------------------
# Tile-size / VMEM heuristics
# -----------------------------------------------------------------------------
def _tpu_vmem_capacity():
    try:
        info = pltpu.get_tpu_info()
        return int(getattr(info, "vmem_capacity_bytes", 64 * 1024 * 1024))
    except Exception:
        return 64 * 1024 * 1024       # conservative (v7x per-TensorCore VMEM)


def _pick_ff_tile(d_ff):
    if d_ff <= 1024:
        return d_ff
    for t in (1024, 512, 256, 128):
        if d_ff % t == 0:
            return t
    return d_ff


def _step_vmem_bytes(rt, d_model, d_ff, h, q, v, cs, ff_tile):
    nc = max(rt // cs, 1)
    qkv_cols = 2 * h * q + h * v
    b = 0
    b += 2 * 2 * rt * d_model * 4                                  # x / out (dbl-buffered)
    b += 2 * 2 * (d_model * qkv_cols + h * v * d_model
                  + 2 * d_model * d_ff)                            # bf16 weights (dbl-buffered)
    b += rt * qkv_cols * 10                                        # qkv fp32 + chunked copies
    b += h * nc * cs * cs * 10                                     # scores / probs
    b += h * nc * cs * v * 4                                       # attention out
    b += rt * d_model * 4 * 4                                      # sa / x1 / ff / temps
    b += rt * ff_tile * 6                                          # FFN hidden tile
    return b


def _pick_row_tile(R, cs, d_model, d_ff, h, q, v, ff_tile, vmem_cap):
    budget = int(vmem_cap * 0.45)
    cap = 1024 if vmem_cap >= (96 << 20) else 512    # bigger M tiles on v5e/v6e
    cap = min(cap, R)
    if R >= 2 * cs:
        cap = min(cap, R // 2)       # keep >= 2 grid steps (both TCs on v7x)
    best = cs
    m = cs
    while m <= cap:
        if R % m == 0 and _step_vmem_bytes(m, d_model, d_ff, h, q, v,
                                           cs, ff_tile) <= budget:
            best = m
        m += cs
    return best


# -----------------------------------------------------------------------------
# Wrapper
# -----------------------------------------------------------------------------
def encoder_forward(x, raw_params, *, h, q, v, chunk_size):
    B, K, d_model = x.shape
    assert K % chunk_size == 0, "sequence length must be a multiple of chunk_size"
    R = B * K
    x2 = x.reshape(R, d_model)

    wqkv, bqkv, wo, w1, b1, w2, vecd = _pack_params(
        raw_params, h=h, q=q, v=v, chunk_size=chunk_size)
    qkv_cols = wqkv.shape[1]
    d_ff = w1.shape[1]

    vmem_cap = _tpu_vmem_capacity()
    ff_tile = _pick_ff_tile(d_ff)
    # Row tile: chunk-aligned multiple dividing R (chunks never straddle a
    # tile), sized against VMEM capacity, with >= 2 grid steps when possible.
    row_tile = _pick_row_tile(R, chunk_size, d_model, d_ff, h, q, v,
                              ff_tile, vmem_cap)
    grid = (R // row_tile,)
    vmem_limit = max(32 << 20, min(int(vmem_cap * 0.8), 100 << 20))

    kernel = functools.partial(encoder_kernel, h=h, q=q, v=v,
                               chunk_size=chunk_size, ff_tile=ff_tile)

    cost = pl.CostEstimate(
        flops=int(2 * R * d_model * qkv_cols
                  + 2 * h * R * chunk_size * (q + v)
                  + 2 * R * h * v * d_model
                  + 4 * R * d_model * d_ff),
        transcendentals=int(h * R * chunk_size + 2 * R),
        bytes_accessed=int(2 * R * d_model * 4
                           + 2 * (wqkv.size + wo.size + w1.size + w2.size)
                           + 4 * (bqkv.size + b1.size + vecd.size)),
    )

    out2 = pl.pallas_call(
        kernel,
        out_shape=jax.ShapeDtypeStruct((R, d_model), jnp.float32),
        grid=grid,
        in_specs=[
            pl.BlockSpec((row_tile, d_model), lambda i: (i, 0)),    # x rows
            pl.BlockSpec((d_model, qkv_cols), lambda i: (0, 0)),    # packed Wqkv
            pl.BlockSpec((1, qkv_cols), lambda i: (0, 0)),          # packed qkv bias
            pl.BlockSpec((h, v, d_model), lambda i: (0, 0, 0)),     # Wo per head
            pl.BlockSpec((d_model, d_ff), lambda i: (0, 0)),        # W1
            pl.BlockSpec((1, d_ff), lambda i: (0, 0)),              # b1
            pl.BlockSpec((d_ff, d_model), lambda i: (0, 0)),        # W2
            pl.BlockSpec((6, d_model), lambda i: (0, 0)),           # packed vectors
        ],
        out_specs=pl.BlockSpec((row_tile, d_model), lambda i: (i, 0)),
        compiler_params=pltpu.CompilerParams(
            dimension_semantics=("parallel",),
            vmem_limit_bytes=vmem_limit),
        cost_estimate=cost,
    )(x2, wqkv, bqkv, wo, w1, b1, w2, vecd)
    return out2.reshape(B, K, d_model)


# -----------------------------------------------------------------------------
# Pure-JAX fp32 reference mirroring the PyTorch chunked-MHA encoder exactly.
# -----------------------------------------------------------------------------
def ref_encoder(x, rp, *, h, q, v, chunk_size):
    B, K, d_model = x.shape
    n_chunk = K // chunk_size

    def lin(z, w, b):
        return z @ w + b

    def split_heads_chunks(z):
        z = jnp.concatenate(jnp.split(z, h, axis=-1), axis=0)        # (h*B, K, .)
        z = jnp.concatenate(jnp.split(z, n_chunk, axis=1), axis=0)   # (nc*h*B, cs, .)
        return z

    Qs = split_heads_chunks(lin(x, rp['wq'], rp['bq']))
    Ks = split_heads_chunks(lin(x, rp['wk'], rp['bk']))
    Vs = split_heads_chunks(lin(x, rp['wv'], rp['bv']))

    scores = jnp.einsum('bij,bkj->bik', Qs, Ks) / math.sqrt(chunk_size)
    scores = jax.nn.softmax(scores, axis=-1)
    att = jnp.einsum('bik,bkv->biv', scores, Vs)
    att = jnp.concatenate(jnp.split(att, n_chunk, axis=0), axis=1)   # (h*B, K, v)
    att = jnp.concatenate(jnp.split(att, h, axis=0), axis=-1)        # (B, K, h*v)
    sa = lin(att, rp['wo'], rp['bo'])

    def layer_norm(y, g, b, eps=1e-5):
        mu = jnp.mean(y, axis=-1, keepdims=True)
        var = jnp.mean((y - mu) ** 2, axis=-1, keepdims=True)
        return (y - mu) / jnp.sqrt(var + eps) * g + b

    x1 = layer_norm(sa + x, rp['ln1_g'], rp['ln1_b'])
    ff = lin(jnp.maximum(lin(x1, rp['w1'], rp['b1']), 0.0), rp['w2'], rp['b2'])
    return layer_norm(ff + x1, rp['ln2_g'], rp['ln2_b'])


if __name__ == "__main__":
    # Small synthetic configuration.
    B, K, d_model = 2, 16, 32
    h, q, v = 4, 8, 8
    chunk_size = 8          # n_chunk = 2 per sequence
    d_ff = 64               # reduced from the PyTorch default 2048 for the toy test

    key = jax.random.PRNGKey(0)
    ks = jax.random.split(key, 16)

    def w(k, shape, scale=0.05):
        return (scale * jax.random.normal(k, shape)).astype(jnp.float32)

    raw = dict(
        wq=w(ks[0], (d_model, q * h)), bq=w(ks[1], (q * h,)),
        wk=w(ks[2], (d_model, q * h)), bk=w(ks[3], (q * h,)),
        wv=w(ks[4], (d_model, v * h)), bv=w(ks[5], (v * h,)),
        wo=w(ks[6], (v * h, d_model)), bo=w(ks[7], (d_model,)),
        ln1_g=jnp.ones((d_model,), jnp.float32),
        ln1_b=jnp.zeros((d_model,), jnp.float32),
        w1=w(ks[8], (d_model, d_ff)), b1=w(ks[9], (d_ff,)),
        w2=w(ks[10], (d_ff, d_model)), b2=w(ks[11], (d_model,)),
        ln2_g=jnp.ones((d_model,), jnp.float32),
        ln2_b=jnp.zeros((d_model,), jnp.float32),
    )

    x = jax.random.normal(ks[12], (B, K, d_model), dtype=jnp.float32)

    out = encoder_forward(x, raw, h=h, q=q, v=v, chunk_size=chunk_size)
    out = jax.block_until_ready(out)

    ref = ref_encoder(x, raw, h=h, q=q, v=v, chunk_size=chunk_size)
    assert out.shape == (B, K, d_model)
    # Kernel uses bf16 MXU matmuls + approx reciprocal; reference is pure fp32.
    err = float(jnp.max(jnp.abs(out - ref)))
    assert err < 3e-2, f"max abs err vs fp32 reference: {err}"

    print("KERNEL_OK")
</pallas_src>

<mosaic_0001>
module attributes {stable_mosaic.version = 11 : i64} {
  func.func @encoder_kernel(%arg0: i32, %arg1: memref<16x32xf32, #tpu.memory_space<vmem>>, %arg2: memref<32x96xbf16, #tpu.memory_space<vmem>>, %arg3: memref<1x96xf32, #tpu.memory_space<vmem>>, %arg4: memref<4x8x32xbf16, #tpu.memory_space<vmem>>, %arg5: memref<32x64xbf16, #tpu.memory_space<vmem>>, %arg6: memref<1x64xf32, #tpu.memory_space<vmem>>, %arg7: memref<64x32xbf16, #tpu.memory_space<vmem>>, %arg8: memref<6x32xf32, #tpu.memory_space<vmem>>, %arg9: memref<16x32xf32, #tpu.memory_space<vmem>>) attributes {dimension_semantics = [#tpu.dimension_semantics<parallel>], iteration_bounds = array<i64: 2>, scalar_prefetch = 0 : i64, scratch_operands = 0 : i64, tpu.core_type = #tpu.core_type<tc>, window_params = [{transform_indices = @transform_0, window_bounds = array<i64: 16, 32>}, {pipeline_mode = #tpu.pipeline_mode<synchronous>, transform_indices = @transform_1, window_bounds = array<i64: 32, 96>}, {pipeline_mode = #tpu.pipeline_mode<synchronous>, transform_indices = @transform_2, window_bounds = array<i64: 1, 96>}, {pipeline_mode = #tpu.pipeline_mode<synchronous>, transform_indices = @transform_3, window_bounds = array<i64: 4, 8, 32>}, {pipeline_mode = #tpu.pipeline_mode<synchronous>, transform_indices = @transform_4, window_bounds = array<i64: 32, 64>}, {pipeline_mode = #tpu.pipeline_mode<synchronous>, transform_indices = @transform_5, window_bounds = array<i64: 1, 64>}, {pipeline_mode = #tpu.pipeline_mode<synchronous>, transform_indices = @transform_6, window_bounds = array<i64: 64, 32>}, {pipeline_mode = #tpu.pipeline_mode<synchronous>, transform_indices = @transform_7, window_bounds = array<i64: 6, 32>}, {transform_indices = @transform_8, window_bounds = array<i64: 16, 32>}]} {
    %c0 = arith.constant 0 : index
    %c0_0 = arith.constant 0 : index
    %0 = vector.load %arg1[%c0, %c0_0] : memref<16x32xf32, #tpu.memory_space<vmem>>, vector<16x32xf32>
    %1 = arith.truncf %0 : vector<16x32xf32> to vector<16x32xbf16>
    %c0_1 = arith.constant 0 : index
    %c0_2 = arith.constant 0 : index
    %2 = vector.load %arg8[%c0_1, %c0_2] : memref<6x32xf32, #tpu.memory_space<vmem>>, vector<6x32xf32>
    %c0_3 = arith.constant 0 : index
    %c0_4 = arith.constant 0 : index
    %3 = vector.load %arg2[%c0_3, %c0_4] : memref<32x96xbf16, #tpu.memory_space<vmem>>, vector<32x96xbf16>
    %cst = arith.constant dense<0.000000e+00> : vector<16x96xf32>
    %4 = tpu.matmul %1, %3, %cst {dimension_numbers = #tpu.dot_dimension_numbers<[1], [0], [0], [1], [0, 0, 1, 1], [], []>} : vector<16x32xbf16>, vector<32x96xbf16>, vector<16x96xf32> -> vector<16x96xf32>
    %c0_5 = arith.constant 0 : index
    %c0_6 = arith.constant 0 : index
    %5 = vector.load %arg3[%c0_5, %c0_6] : memref<1x96xf32, #tpu.memory_space<vmem>>, vector<1x96xf32>
    %6 = vector.broadcast %5 : vector<1x96xf32> to vector<16x96xf32>
    %7 = arith.addf %4, %6 : vector<16x96xf32>
    %8 = vector.extract_strided_slice %7 {offsets = [0, 0], sizes = [16, 8], strides = [1, 1]} : vector<16x96xf32> to vector<16x8xf32>
    %9 = vector.shape_cast %8 : vector<16x8xf32> to vector<2x8x8xf32>
    %10 = vector.extract_strided_slice %7 {offsets = [0, 8], sizes = [16, 8], strides = [1, 1]} : vector<16x96xf32> to vector<16x8xf32>
    %11 = vector.shape_cast %10 : vector<16x8xf32> to vector<2x8x8xf32>
    %12 = vector.extract_strided_slice %7 {offsets = [0, 16], sizes = [16, 8], strides = [1, 1]} : vector<16x96xf32> to vector<16x8xf32>
    %13 = vector.shape_cast %12 : vector<16x8xf32> to vector<2x8x8xf32>
    %14 = vector.extract_strided_slice %7 {offsets = [0, 24], sizes = [16, 8], strides = [1, 1]} : vector<16x96xf32> to vector<16x8xf32>
    %15 = vector.shape_cast %14 : vector<16x8xf32> to vector<2x8x8xf32>
    %16 = tpu.concatenate %9, %11, %13, %15 in 0 : vector<2x8x8xf32>, vector<2x8x8xf32>, vector<2x8x8xf32>, vector<2x8x8xf32> -> vector<8x8x8xf32>
    %17 = arith.truncf %16 : vector<8x8x8xf32> to vector<8x8x8xbf16>
    %18 = vector.extract_strided_slice %7 {offsets = [0, 32], sizes = [16, 8], strides = [1, 1]} : vector<16x96xf32> to vector<16x8xf32>
    %19 = vector.shape_cast %18 : vector<16x8xf32> to vector<2x8x8xf32>
    %20 = vector.extract_strided_slice %7 {offsets = [0, 40], sizes = [16, 8], strides = [1, 1]} : vector<16x96xf32> to vector<16x8xf32>
    %21 = vector.shape_cast %20 : vector<16x8xf32> to vector<2x8x8xf32>
    %22 = vector.extract_strided_slice %7 {offsets = [0, 48], sizes = [16, 8], strides = [1, 1]} : vector<16x96xf32> to vector<16x8xf32>
    %23 = vector.shape_cast %22 : vector<16x8xf32> to vector<2x8x8xf32>
    %24 = vector.extract_strided_slice %7 {offsets = [0, 56], sizes = [16, 8], strides = [1, 1]} : vector<16x96xf32> to vector<16x8xf32>
    %25 = vector.shape_cast %24 : vector<16x8xf32> to vector<2x8x8xf32>
    %26 = tpu.concatenate %19, %21, %23, %25 in 0 : vector<2x8x8xf32>, vector<2x8x8xf32>, vector<2x8x8xf32>, vector<2x8x8xf32> -> vector<8x8x8xf32>
    %27 = arith.truncf %26 : vector<8x8x8xf32> to vector<8x8x8xbf16>
    %28 = vector.extract_strided_slice %7 {offsets = [0, 64], sizes = [16, 8], strides = [1, 1]} : vector<16x96xf32> to vector<16x8xf32>
    %29 = vector.shape_cast %28 : vector<16x8xf32> to vector<2x8x8xf32>
    %30 = vector.extract_strided_slice %7 {offsets = [0, 72], sizes = [16, 8], strides = [1, 1]} : vector<16x96xf32> to vector<16x8xf32>
    %31 = vector.shape_cast %30 : vector<16x8xf32> to vector<2x8x8xf32>
    %32 = vector.extract_strided_slice %7 {offsets = [0, 80], sizes = [16, 8], strides = [1, 1]} : vector<16x96xf32> to vector<16x8xf32>
    %33 = vector.shape_cast %32 : vector<16x8xf32> to vector<2x8x8xf32>
    %34 = vector.extract_strided_slice %7 {offsets = [0, 88], sizes = [16, 8], strides = [1, 1]} : vector<16x96xf32> to vector<16x8xf32>
    %35 = vector.shape_cast %34 : vector<16x8xf32> to vector<2x8x8xf32>
    %36 = tpu.concatenate %29, %31, %33, %35 in 0 : vector<2x8x8xf32>, vector<2x8x8xf32>, vector<2x8x8xf32>, vector<2x8x8xf32> -> vector<8x8x8xf32>
    %37 = arith.truncf %36 : vector<8x8x8xf32> to vector<8x8x8xbf16>
    "tpu.trace_start"() <{level = 10 : i32, message = "bik,bjk->bij"}> : () -> ()
    %cst_7 = arith.constant dense<0.000000e+00> : vector<8x8x8xf32>
    %38 = tpu.matmul %17, %27, %cst_7 {dimension_numbers = #tpu.dot_dimension_numbers<[2], [2], [1], [1], [0, 0, 0, 1, 1, 1], [0], [0]>} : vector<8x8x8xbf16>, vector<8x8x8xbf16>, vector<8x8x8xf32> -> vector<8x8x8xf32>
    "tpu.trace_stop"() : () -> ()
    %cst_8 = arith.constant dense<0xFF800000> : vector<8x8xf32>
    %39 = vector.multi_reduction <maximumf>, %38, %cst_8 [2] : vector<8x8x8xf32> to vector<8x8xf32>
    %40 = vector.shape_cast %39 : vector<8x8xf32> to vector<8x8x1xf32>
    %41 = vector.broadcast %40 : vector<8x8x1xf32> to vector<8x8x8xf32>
    %42 = arith.subf %38, %41 : vector<8x8x8xf32>
    %43 = math.exp %42 : vector<8x8x8xf32>
    %cst_9 = arith.constant dense<0.000000e+00> : vector<8x8xf32>
    %44 = vector.multi_reduction <add>, %43, %cst_9 [2] : vector<8x8x8xf32> to vector<8x8xf32>
    %45 = vector.shape_cast %44 : vector<8x8xf32> to vector<8x8x1xf32>
    %46 = tpu.reciprocal %45 {approx = true} : vector<8x8x1xf32> -> vector<8x8x1xf32>
    %47 = vector.broadcast %46 : vector<8x8x1xf32> to vector<8x8x8xf32>
    %48 = arith.mulf %43, %47 : vector<8x8x8xf32>
    %49 = arith.truncf %48 : vector<8x8x8xf32> to vector<8x8x8xbf16>
    "tpu.trace_start"() <{level = 10 : i32, message = "bij,bjv->biv"}> : () -> ()
    %cst_10 = arith.constant dense<0.000000e+00> : vector<8x8x8xf32>
    %50 = tpu.matmul %49, %37, %cst_10 {dimension_numbers = #tpu.dot_dimension_numbers<[2], [1], [1], [2], [0, 0, 0, 1, 1, 2], [0], [0]>} : vector<8x8x8xbf16>, vector<8x8x8xbf16>, vector<8x8x8xf32> -> vector<8x8x8xf32>
    %cst_11 = arith.constant 0.000000e+00 : f32
    "tpu.trace_stop"() : () -> ()
    %51 = vector.broadcast %cst_11 : f32 to vector<16x32xf32>
    %52 = vector.extract_strided_slice %50 {offsets = [0, 0, 0], sizes = [2, 8, 8], strides = [1, 1, 1]} : vector<8x8x8xf32> to vector<2x8x8xf32>
    %53 = vector.shape_cast %52 : vector<2x8x8xf32> to vector<16x8xf32>
    %54 = arith.truncf %53 : vector<16x8xf32> to vector<16x8xbf16>
    %c0_12 = arith.constant 0 : index
    %c0_13 = arith.constant 0 : index
    %c0_14 = arith.constant 0 : index
    %55 = vector.load %arg4[%c0_12, %c0_13, %c0_14] : memref<4x8x32xbf16, #tpu.memory_space<vmem>>, vector<1x8x32xbf16>
    %56 = vector.shape_cast %55 : vector<1x8x32xbf16> to vector<8x32xbf16>
    %cst_15 = arith.constant dense<0.000000e+00> : vector<16x32xf32>
    %57 = tpu.matmul %54, %56, %cst_15 {dimension_numbers = #tpu.dot_dimension_numbers<[1], [0], [0], [1], [0, 0, 1, 1], [], []>} : vector<16x8xbf16>, vector<8x32xbf16>, vector<16x32xf32> -> vector<16x32xf32>
    %58 = arith.addf %51, %57 : vector<16x32xf32>
    %59 = vector.extract_strided_slice %50 {offsets = [2, 0, 0], sizes = [2, 8, 8], strides = [1, 1, 1]} : vector<8x8x8xf32> to vector<2x8x8xf32>
    %60 = vector.shape_cast %59 : vector<2x8x8xf32> to vector<16x8xf32>
    %61 = arith.truncf %60 : vector<16x8xf32> to vector<16x8xbf16>
    %c1 = arith.constant 1 : index
    %c0_16 = arith.constant 0 : index
    %c0_17 = arith.constant 0 : index
    %62 = vector.load %arg4[%c1, %c0_16, %c0_17] : memref<4x8x32xbf16, #tpu.memory_space<vmem>>, vector<1x8x32xbf16>
    %63 = vector.shape_cast %62 : vector<1x8x32xbf16> to vector<8x32xbf16>
    %cst_18 = arith.constant dense<0.000000e+00> : vector<16x32xf32>
    %64 = tpu.matmul %61, %63, %cst_18 {dimension_numbers = #tpu.dot_dimension_numbers<[1], [0], [0], [1], [0, 0, 1, 1], [], []>} : vector<16x8xbf16>, vector<8x32xbf16>, vector<16x32xf32> -> vector<16x32xf32>
    %65 = arith.addf %58, %64 : vector<16x32xf32>
    %66 = vector.extract_strided_slice %50 {offsets = [4, 0, 0], sizes = [2, 8, 8], strides = [1, 1, 1]} : vector<8x8x8xf32> to vector<2x8x8xf32>
    %67 = vector.shape_cast %66 : vector<2x8x8xf32> to vector<16x8xf32>
    %68 = arith.truncf %67 : vector<16x8xf32> to vector<16x8xbf16>
    %c2 = arith.constant 2 : index
    %c0_19 = arith.constant 0 : index
    %c0_20 = arith.constant 0 : index
    %69 = vector.load %arg4[%c2, %c0_19, %c0_20] : memref<4x8x32xbf16, #tpu.memory_space<vmem>>, vector<1x8x32xbf16>
    %70 = vector.shape_cast %69 : vector<1x8x32xbf16> to vector<8x32xbf16>
    %cst_21 = arith.constant dense<0.000000e+00> : vector<16x32xf32>
    %71 = tpu.matmul %68, %70, %cst_21 {dimension_numbers = #tpu.dot_dimension_numbers<[1], [0], [0], [1], [0, 0, 1, 1], [], []>} : vector<16x8xbf16>, vector<8x32xbf16>, vector<16x32xf32> -> vector<16x32xf32>
    %72 = arith.addf %65, %71 : vector<16x32xf32>
    %73 = vector.extract_strided_slice %50 {offsets = [6, 0, 0], sizes = [2, 8, 8], strides = [1, 1, 1]} : vector<8x8x8xf32> to vector<2x8x8xf32>
    %74 = vector.shape_cast %73 : vector<2x8x8xf32> to vector<16x8xf32>
    %75 = arith.truncf %74 : vector<16x8xf32> to vector<16x8xbf16>
    %c3 = arith.constant 3 : index
    %c0_22 = arith.constant 0 : index
    %c0_23 = arith.constant 0 : index
    %76 = vector.load %arg4[%c3, %c0_22, %c0_23] : memref<4x8x32xbf16, #tpu.memory_space<vmem>>, vector<1x8x32xbf16>
    %77 = vector.shape_cast %76 : vector<1x8x32xbf16> to vector<8x32xbf16>
    %cst_24 = arith.constant dense<0.000000e+00> : vector<16x32xf32>
    %78 = tpu.matmul %75, %77, %cst_24 {dimension_numbers = #tpu.dot_dimension_numbers<[1], [0], [0], [1], [0, 0, 1, 1], [], []>} : vector<16x8xbf16>, vector<8x32xbf16>, vector<16x32xf32> -> vector<16x32xf32>
    %79 = arith.addf %72, %78 : vector<16x32xf32>
    %80 = vector.extract_strided_slice %2 {offsets = [0, 0], sizes = [1, 32], strides = [1, 1]} : vector<6x32xf32> to vector<1x32xf32>
    %81 = vector.broadcast %80 : vector<1x32xf32> to vector<16x32xf32>
    %82 = arith.addf %79, %81 : vector<16x32xf32>
    %83 = arith.addf %82, %0 : vector<16x32xf32>
    %84 = vector.extract_strided_slice %2 {offsets = [1, 0], sizes = [1, 32], strides = [1, 1]} : vector<6x32xf32> to vector<1x32xf32>
    %85 = vector.extract_strided_slice %2 {offsets = [2, 0], sizes = [1, 32], strides = [1, 1]} : vector<6x32xf32> to vector<1x32xf32>
    %cst_25 = arith.constant dense<0.000000e+00> : vector<16xf32>
    %86 = vector.multi_reduction <add>, %83, %cst_25 [1] : vector<16x32xf32> to vector<16xf32>
    %87 = vector.shape_cast %86 : vector<16xf32> to vector<16x1xf32>
    %cst_26 = arith.constant 3.200000e+01 : f32
    %88 = vector.broadcast %cst_26 : f32 to vector<16x1xf32>
    %89 = arith.divf %87, %88 : vector<16x1xf32>
    %90 = vector.broadcast %89 : vector<16x1xf32> to vector<16x32xf32>
    %91 = arith.subf %83, %90 : vector<16x32xf32>
    %92 = arith.mulf %91, %91 : vector<16x32xf32>
    %cst_27 = arith.constant dense<0.000000e+00> : vector<16xf32>
    %93 = vector.multi_reduction <add>, %92, %cst_27 [1] : vector<16x32xf32> to vector<16xf32>
    %94 = vector.shape_cast %93 : vector<16xf32> to vector<16x1xf32>
    %cst_28 = arith.constant 3.200000e+01 : f32
    %95 = vector.broadcast %cst_28 : f32 to vector<16x1xf32>
    %96 = arith.divf %94, %95 : vector<16x1xf32>
    %97 = vector.broadcast %89 : vector<16x1xf32> to vector<16x32xf32>
    %98 = arith.subf %83, %97 : vector<16x32xf32>
    %cst_29 = arith.constant 9.99999974E-6 : f32
    %99 = vector.broadcast %cst_29 : f32 to vector<16x1xf32>
    %100 = arith.addf %96, %99 : vector<16x1xf32>
    %101 = math.rsqrt %100 : vector<16x1xf32>
    %102 = vector.broadcast %101 : vector<16x1xf32> to vector<16x32xf32>
    %103 = arith.mulf %98, %102 : vector<16x32xf32>
    %104 = vector.broadcast %84 : vector<1x32xf32> to vector<16x32xf32>
    %105 = arith.mulf %103, %104 : vector<16x32xf32>
    %106 = vector.broadcast %85 : vector<1x32xf32> to vector<16x32xf32>
    %107 = arith.addf %105, %106 : vector<16x32xf32>
    %108 = arith.truncf %107 : vector<16x32xf32> to vector<16x32xbf16>
    %cst_30 = arith.constant 0.000000e+00 : f32
    %109 = vector.broadcast %cst_30 : f32 to vector<16x32xf32>
    %c0_31 = arith.constant 0 : index
    %c0_32 = arith.constant 0 : index
    %110 = vector.load %arg5[%c0_31, %c0_32] : memref<32x64xbf16, #tpu.memory_space<vmem>>, vector<32x64xbf16>
    %cst_33 = arith.constant dense<0.000000e+00> : vector<16x64xf32>
    %111 = tpu.matmul %108, %110, %cst_33 {dimension_numbers = #tpu.dot_dimension_numbers<[1], [0], [0], [1], [0, 0, 1, 1], [], []>} : vector<16x32xbf16>, vector<32x64xbf16>, vector<16x64xf32> -> vector<16x64xf32>
    %c0_34 = arith.constant 0 : index
    %c0_35 = arith.constant 0 : index
    %112 = vector.load %arg6[%c0_34, %c0_35] : memref<1x64xf32, #tpu.memory_space<vmem>>, vector<1x64xf32>
    %113 = vector.broadcast %112 : vector<1x64xf32> to vector<16x64xf32>
    %114 = arith.addf %111, %113 : vector<16x64xf32>
    %cst_36 = arith.constant 0.000000e+00 : f32
    %115 = vector.broadcast %cst_36 : f32 to vector<16x64xf32>
    %116 = arith.maximumf %114, %115 : vector<16x64xf32>
    %117 = arith.truncf %116 : vector<16x64xf32> to vector<16x64xbf16>
    %c0_37 = arith.constant 0 : index
    %c0_38 = arith.constant 0 : index
    %118 = vector.load %arg7[%c0_37, %c0_38] : memref<64x32xbf16, #tpu.memory_space<vmem>>, vector<64x32xbf16>
    %cst_39 = arith.constant dense<0.000000e+00> : vector<16x32xf32>
    %119 = tpu.matmul %117, %118, %cst_39 {dimension_numbers = #tpu.dot_dimension_numbers<[1], [0], [0], [1], [0, 0, 1, 1], [], []>} : vector<16x64xbf16>, vector<64x32xbf16>, vector<16x32xf32> -> vector<16x32xf32>
    %120 = arith.addf %109, %119 : vector<16x32xf32>
    %121 = vector.extract_strided_slice %2 {offsets = [3, 0], sizes = [1, 32], strides = [1, 1]} : vector<6x32xf32> to vector<1x32xf32>
    %122 = vector.broadcast %121 : vector<1x32xf32> to vector<16x32xf32>
    %123 = arith.addf %120, %122 : vector<16x32xf32>
    %124 = arith.addf %123, %107 : vector<16x32xf32>
    %125 = vector.extract_strided_slice %2 {offsets = [4, 0], sizes = [1, 32], strides = [1, 1]} : vector<6x32xf32> to vector<1x32xf32>
    %126 = vector.extract_strided_slice %2 {offsets = [5, 0], sizes = [1, 32], strides = [1, 1]} : vector<6x32xf32> to vector<1x32xf32>
    %cst_40 = arith.constant dense<0.000000e+00> : vector<16xf32>
    %127 = vector.multi_reduction <add>, %124, %cst_40 [1] : vector<16x32xf32> to vector<16xf32>
    %128 = vector.shape_cast %127 : vector<16xf32> to vector<16x1xf32>
    %cst_41 = arith.constant 3.200000e+01 : f32
    %129 = vector.broadcast %cst_41 : f32 to vector<16x1xf32>
    %130 = arith.divf %128, %129 : vector<16x1xf32>
    %131 = vector.broadcast %130 : vector<16x1xf32> to vector<16x32xf32>
    %132 = arith.subf %124, %131 : vector<16x32xf32>
    %133 = arith.mulf %132, %132 : vector<16x32xf32>
    %cst_42 = arith.constant dense<0.000000e+00> : vector<16xf32>
    %134 = vector.multi_reduction <add>, %133, %cst_42 [1] : vector<16x32xf32> to vector<16xf32>
    %135 = vector.shape_cast %134 : vector<16xf32> to vector<16x1xf32>
    %cst_43 = arith.constant 3.200000e+01 : f32
    %136 = vector.broadcast %cst_43 : f32 to vector<16x1xf32>
    %137 = arith.divf %135, %136 : vector<16x1xf32>
    %138 = vector.broadcast %130 : vector<16x1xf32> to vector<16x32xf32>
    %139 = arith.subf %124, %138 : vector<16x32xf32>
    %cst_44 = arith.constant 9.99999974E-6 : f32
    %140 = vector.broadcast %cst_44 : f32 to vector<16x1xf32>
    %141 = arith.addf %137, %140 : vector<16x1xf32>
    %142 = math.rsqrt %141 : vector<16x1xf32>
    %143 = vector.broadcast %142 : vector<16x1xf32> to vector<16x32xf32>
    %144 = arith.mulf %139, %143 : vector<16x32xf32>
    %145 = vector.broadcast %125 : vector<1x32xf32> to vector<16x32xf32>
    %146 = arith.mulf %144, %145 : vector<16x32xf32>
    %147 = vector.broadcast %126 : vector<1x32xf32> to vector<16x32xf32>
    %148 = arith.addf %146, %147 : vector<16x32xf32>
    %c0_45 = arith.constant 0 : index
    %c0_46 = arith.constant 0 : index
    %149 = vector.load %arg9[%c0_45, %c0_46] : memref<16x32xf32, #tpu.memory_space<vmem>>, vector<16x32xf32>
    tpu.vector_store %arg9[%c0_45, %c0_46], %148 {strides = array<i32>} : memref<16x32xf32, #tpu.memory_space<vmem>>, vector<16x32xf32>,
    return
  }
  func.func @transform_0(%arg0: i32) -> (i32, i32) {
    %c0_i32 = arith.constant 0 : i32
    %c0_i32_0 = arith.constant 0 : i32
    return %arg0, %c0_i32 : i32, i32
  }
  func.func @transform_1(%arg0: i32) -> (i32, i32) {
    %c0_i32 = arith.constant 0 : i32
    %c0_i32_0 = arith.constant 0 : i32
    %c0_i32_1 = arith.constant 0 : i32
    return %c0_i32, %c0_i32_0 : i32, i32
  }
  func.func @transform_2(%arg0: i32) -> (i32, i32) {
    %c0_i32 = arith.constant 0 : i32
    %c0_i32_0 = arith.constant 0 : i32
    %c0_i32_1 = arith.constant 0 : i32
    return %c0_i32, %c0_i32_0 : i32, i32
  }
  func.func @transform_3(%arg0: i32) -> (i32, i32, i32) {
    %c0_i32 = arith.constant 0 : i32
    %c0_i32_0 = arith.constant 0 : i32
    %c0_i32_1 = arith.constant 0 : i32
    %c0_i32_2 = arith.constant 0 : i32
    return %c0_i32, %c0_i32_0, %c0_i32_1 : i32, i32, i32
  }
  func.func @transform_4(%arg0: i32) -> (i32, i32) {
    %c0_i32 = arith.constant 0 : i32
    %c0_i32_0 = arith.constant 0 : i32
    %c0_i32_1 = arith.constant 0 : i32
    return %c0_i32, %c0_i32_0 : i32, i32
  }
  func.func @transform_5(%arg0: i32) -> (i32, i32) {
    %c0_i32 = arith.constant 0 : i32
    %c0_i32_0 = arith.constant 0 : i32
    %c0_i32_1 = arith.constant 0 : i32
    return %c0_i32, %c0_i32_0 : i32, i32
  }
  func.func @transform_6(%arg0: i32) -> (i32, i32) {
    %c0_i32 = arith.constant 0 : i32
    %c0_i32_0 = arith.constant 0 : i32
    %c0_i32_1 = arith.constant 0 : i32
    return %c0_i32, %c0_i32_0 : i32, i32
  }
  func.func @transform_7(%arg0: i32) -> (i32, i32) {
    %c0_i32 = arith.constant 0 : i32
    %c0_i32_0 = arith.constant 0 : i32
    %c0_i32_1 = arith.constant 0 : i32
    return %c0_i32, %c0_i32_0 : i32, i32
  }
  func.func @transform_8(%arg0: i32) -> (i32, i32) {
    %c0_i32 = arith.constant 0 : i32
    %c0_i32_0 = arith.constant 0 : i32
    return %arg0, %c0_i32 : i32, i32
  }
}

</mosaic_0001>

<llo_original>
// kernel: tpu_custom_call.1
$region0: #{tpu_custom_call.1}
  #allocation0 [shape = 'u32[]', space=smem, size = 0x4, offset = 0x4, fixed_abs, tag = 'smem constant byte address 0x4 - core index']
  #allocation1 [shape = 'u32[72,128]{1,0:T(1,128)}', space=vmem, size = 0x9000, scoped, tag = 'internal scratch']
  %s0 = inlined_call_operand.vmem [shape: f32[32,32], index: 0, kind: input, shape index: {}]
  %s1 = inlined_call_operand.vmem [shape: bf16[32,96], index: 1, kind: input, shape index: {}]
  %s2 = inlined_call_operand.vmem [shape: f32[1,96], index: 2, kind: input, shape index: {}]
  %s3 = inlined_call_operand.hbm [shape: bf16[4,8,32], index: 3, kind: input, shape index: {}]
  %s4 = inlined_call_operand.hbm [shape: bf16[32,64], index: 4, kind: input, shape index: {}]
  %s5 = inlined_call_operand.vmem [shape: f32[1,64], index: 5, kind: input, shape index: {}]
  %s6 = inlined_call_operand.vmem [shape: bf16[64,32], index: 6, kind: input, shape index: {}]
  %s7 = inlined_call_operand.hbm [shape: f32[6,32], index: 7, kind: input, shape index: {}]
  %s8 = inlined_call_operand.hbm [shape: f32[32,32], index: 8, kind: output, shape index: {}]
  %s9 = sld [smem:[#allocation0]]
  $region77: #{tpu_custom_call.1} parent=0
    _
  %s11 = ssub.s32 1, %s9
  %s12 = scalar_select 0, %s11, %s9
  $region1: #{tpu_custom_call.1} parent=0
    #allocation2 [shape = 'u8[8192]{0}', space=vmem, size = 0x2000, scoped, tag = 'input window, operand 3, single buffered']
    #allocation3 [shape = 's32[2]{0}', space=sflag, size = 0x8, scoped, tag = 'scoped memory for tpu_custom_call.1']
    #allocation4 [shape = 's32[2]{0}', space=sflag, size = 0x8, scoped, tag = 'scoped memory for tpu_custom_call.1']
    #allocation5 [shape = 'u8[8192]{0}', space=vmem, size = 0x2000, scoped, tag = 'input window, operand 4, single buffered']
    #allocation6 [shape = 's32[1]{0}', space=sflag, size = 0x4, scoped, tag = 'scoped memory for tpu_custom_call.1']
    #allocation7 [shape = 'u8[4096]{0}', space=vmem, size = 0x1000, scoped, tag = 'input window, operand 7, single buffered']
    #allocation8 [shape = 'u8[16384]{0}', space=vmem, size = 0x4000, scoped, tag = 'output window, operand 0']
    %13 = vsyncpa [#allocation3], 0
    %14 = vsyncpa [#allocation6], 0
    %15 = vsyncpa [#allocation4], 0
    %s16 = scalar_lea.sflag [#allocation4], 1
    %17 = vsyncpa %s16, 0
    loop: start=0, step=1, limit=4
    $region2: #{tpu_custom_call.1} parent=1 // loop_pre_header
      _
    $region3: #{tpu_custom_call.1} parent=1 // loop_header
      %s19 = sphi 0, %s23
      %p20 = scmp.ge.s32.totalorder %s19, 4
      %s29 = sphi 0, %s31
      %s32 = sphi 0, %s29
      %s33 = sphi 0, %s32
      %s49 = sphi 0, %s33
      %s53 = sphi 0, %s53
      %s55 = sphi 0, %s53
      %s56 = sphi 0, %s55
      %s70 = sphi 0, %s56
      %s74 = sphi 0, %s74
      %s76 = sphi 0, %s74
      %s77 = sphi 0, %s76
      %s91 = sphi 0, %s77
      %s95 = sphi 0, %s95
      %s97 = sphi 0, %s95
      %s98 = sphi 0, %s97
      %s112 = sphi 0, %s98
      %s116 = sphi 0, %s116
      %s118 = sphi 0, %s116
      %s119 = sphi 0, %s118
      %s133 = sphi 0, %s119
      %s137 = sphi 0, %s137
      %s139 = sphi 0, %s137
      %s140 = sphi 0, %s139
      %s154 = sphi 0, %s140
      %s158 = sphi 0, %s158
      %s160 = sphi 0, %s158
      %s161 = sphi 0, %s160
      %s175 = sphi 0, %s161
      %s179 = sphi 0, %s179
      %s181 = sphi 0, %s179
      %s182 = sphi 0, %s181
      %s196 = sphi 0, %s182
      %s202 = sphi 0, %s204
      %s205 = sphi 0, %s202
      %s206 = sphi 0, %s205
      %s222 = sphi 0, %s206
    $region4: #{tpu_custom_call.1} parent=1 // loop_header_branch
      %22 = sbr.rel (%p20) target = $region8
    $region5: #{tpu_custom_call.1} parent=1 // loop_body
      %s24 = ssub.s32 %s19, 1
      %s25 = ssub.s32 %s19, 2
      %s26 = sadd.s32 %s19, 1
      %s27 = ssub.s32 %s19, %s26
      %p28 = scmp.eq.s32.totalorder %s27, 0
      %s30 = sadd.s32 %s29, 1
      %s31 = scalar_select %p28, %s29, %s30
      %p34 = pneg %p28
      %p35 = scmp.eq.s32.totalorder %s19, 1
      %p36 = por %p34, %p35
      %p37 = scmp.ne.s32.totalorder %s29, %s32
      %p38 = scmp.eq.s32.totalorder %s19, 0
      %p39 = por %p37, %p38
      %p40 = scmp.ne.s32.totalorder %s29, %s32
      %p41 = scmp.eq.s32.totalorder %s24, 1
      %p42 = por %p40, %p41
      %p43 = scmp.ne.s32.totalorder %s32, %s33
      %p44 = scmp.eq.s32.totalorder %s24, 0
      %p45 = por %p43, %p44
      %p46 = scmp.ne.s32.totalorder %s32, %s33
      %p47 = scmp.eq.s32.totalorder %s25, 1
      %p48 = por %p46, %p47
      %p50 = scmp.ne.s32.totalorder %s33, %s49
      %p51 = scmp.eq.s32.totalorder %s25, 0
      %p52 = por %p50, %p51
      %s54 = sadd.s32 %s53, 1
      %p57 = scmp.eq.s32.totalorder %s19, 1
      %p58 = scmp.ne.s32.totalorder %s53, %s55
      %p59 = scmp.eq.s32.totalorder %s19, 0
      %p60 = por %p58, %p59
      %p61 = scmp.ne.s32.totalorder %s53, %s55
      %p62 = scmp.eq.s32.totalorder %s24, 1
      %p63 = por %p61, %p62
      %p64 = scmp.ne.s32.totalorder %s55, %s56
      %p65 = scmp.eq.s32.totalorder %s24, 0
      %p66 = por %p64, %p65
      %p67 = scmp.ne.s32.totalorder %s55, %s56
      %p68 = scmp.eq.s32.totalorder %s25, 1
      %p69 = por %p67, %p68
      %p71 = scmp.ne.s32.totalorder %s56, %s70
      %p72 = scmp.eq.s32.totalorder %s25, 0
      %p73 = por %p71, %p72
      %s75 = sadd.s32 %s74, 1
      %p78 = scmp.eq.s32.totalorder %s19, 1
      %p79 = scmp.ne.s32.totalorder %s74, %s76
      %p80 = scmp.eq.s32.totalorder %s19, 0
      %p81 = por %p79, %p80
      %p82 = scmp.ne.s32.totalorder %s74, %s76
      %p83 = scmp.eq.s32.totalorder %s24, 1
      %p84 = por %p82, %p83
      %p85 = scmp.ne.s32.totalorder %s76, %s77
      %p86 = scmp.eq.s32.totalorder %s24, 0
      %p87 = por %p85, %p86
      %p88 = scmp.ne.s32.totalorder %s76, %s77
      %p89 = scmp.eq.s32.totalorder %s25, 1
      %p90 = por %p88, %p89
      %p92 = scmp.ne.s32.totalorder %s77, %s91
      %p93 = scmp.eq.s32.totalorder %s25, 0
      %p94 = por %p92, %p93
      %s96 = sadd.s32 %s95, 1
      %p99 = scmp.eq.s32.totalorder %s19, 1
      %p100 = scmp.ne.s32.totalorder %s95, %s97
      %p101 = scmp.eq.s32.totalorder %s19, 0
      %p102 = por %p100, %p101
      %p103 = scmp.ne.s32.totalorder %s95, %s97
      %p104 = scmp.eq.s32.totalorder %s24, 1
      %p105 = por %p103, %p104
      %p106 = scmp.ne.s32.totalorder %s97, %s98
      %p107 = scmp.eq.s32.totalorder %s24, 0
      %p108 = por %p106, %p107
      %p109 = scmp.ne.s32.totalorder %s97, %s98
      %p110 = scmp.eq.s32.totalorder %s25, 1
      %p111 = por %p109, %p110
      %p113 = scmp.ne.s32.totalorder %s98, %s112
      %p114 = scmp.eq.s32.totalorder %s25, 0
      %p115 = por %p113, %p114
      %s117 = sadd.s32 %s116, 1
      %p120 = scmp.eq.s32.totalorder %s19, 1
      %p121 = scmp.ne.s32.totalorder %s116, %s118
      %p122 = scmp.eq.s32.totalorder %s19, 0
      %p123 = por %p121, %p122
      %p124 = scmp.ne.s32.totalorder %s116, %s118
      %p125 = scmp.eq.s32.totalorder %s24, 1
      %p126 = por %p124, %p125
      %p127 = scmp.ne.s32.totalorder %s118, %s119
      %p128 = scmp.eq.s32.totalorder %s24, 0
      %p129 = por %p127, %p128
      %p130 = scmp.ne.s32.totalorder %s118, %s119
      %p131 = scmp.eq.s32.totalorder %s25, 1
      %p132 = por %p130, %p131
      %p134 = scmp.ne.s32.totalorder %s119, %s133
      %p135 = scmp.eq.s32.totalorder %s25, 0
      %p136 = por %p134, %p135
      %s138 = sadd.s32 %s137, 1
      %p141 = scmp.eq.s32.totalorder %s19, 1
      %p142 = scmp.ne.s32.totalorder %s137, %s139
      %p143 = scmp.eq.s32.totalorder %s19, 0
      %p144 = por %p142, %p143
      %p145 = scmp.ne.s32.totalorder %s137, %s139
      %p146 = scmp.eq.s32.totalorder %s24, 1
      %p147 = por %p145, %p146
      %p148 = scmp.ne.s32.totalorder %s139, %s140
      %p149 = scmp.eq.s32.totalorder %s24, 0
      %p150 = por %p148, %p149
      %p151 = scmp.ne.s32.totalorder %s139, %s140
      %p152 = scmp.eq.s32.totalorder %s25, 1
      %p153 = por %p151, %p152
      %p155 = scmp.ne.s32.totalorder %s140, %s154
      %p156 = scmp.eq.s32.totalorder %s25, 0
      %p157 = por %p155, %p156
      %s159 = sadd.s32 %s158, 1
      %p162 = scmp.eq.s32.totalorder %s19, 1
      %p163 = scmp.ne.s32.totalorder %s158, %s160
      %p164 = scmp.eq.s32.totalorder %s19, 0
      %p165 = por %p163, %p164
      %p166 = scmp.ne.s32.totalorder %s158, %s160
      %p167 = scmp.eq.s32.totalorder %s24, 1
      %p168 = por %p166, %p167
      %p169 = scmp.ne.s32.totalorder %s160, %s161
      %p170 = scmp.eq.s32.totalorder %s24, 0
      %p171 = por %p169, %p170
      %p172 = scmp.ne.s32.totalorder %s160, %s161
      %p173 = scmp.eq.s32.totalorder %s25, 1
      %p174 = por %p172, %p173
      %p176 = scmp.ne.s32.totalorder %s161, %s175
      %p177 = scmp.eq.s32.totalorder %s25, 0
      %p178 = por %p176, %p177
      %s180 = sadd.s32 %s179, 1
      %p183 = scmp.eq.s32.totalorder %s19, 1
      %p184 = scmp.ne.s32.totalorder %s179, %s181
      %p185 = scmp.eq.s32.totalorder %s19, 0
      %p186 = por %p184, %p185
      %p187 = scmp.ne.s32.totalorder %s179, %s181
      %p188 = scmp.eq.s32.totalorder %s24, 1
      %p189 = por %p187, %p188
      %p190 = scmp.ne.s32.totalorder %s181, %s182
      %p191 = scmp.eq.s32.totalorder %s24, 0
      %p192 = por %p190, %p191
      %p193 = scmp.ne.s32.totalorder %s181, %s182
      %p194 = scmp.eq.s32.totalorder %s25, 1
      %p195 = por %p193, %p194
      %p197 = scmp.ne.s32.totalorder %s182, %s196
      %p198 = scmp.eq.s32.totalorder %s25, 0
      %p199 = por %p197, %p198
      %s200 = ssub.s32 %s19, %s26
      %p201 = scmp.eq.s32.totalorder %s200, 0
      %s203 = sadd.s32 %s202, 1
      %s204 = scalar_select %p201, %s202, %s203
      %p207 = pneg %p201
      %p208 = scmp.eq.s32.totalorder %s19, 1
      %p209 = por %p207, %p208
      %p210 = scmp.ne.s32.totalorder %s202, %s205
      %p211 = scmp.eq.s32.totalorder %s19, 0
      %p212 = por %p210, %p211
      %p213 = scmp.ne.s32.totalorder %s202, %s205
      %p214 = scmp.eq.s32.totalorder %s24, 1
      %p215 = por %p213, %p214
      %p216 = scmp.ne.s32.totalorder %s205, %s206
      %p217 = scmp.eq.s32.totalorder %s24, 0
      %p218 = por %p216, %p217
      %p219 = scmp.ne.s32.totalorder %s205, %s206
      %p220 = scmp.eq.s32.totalorder %s25, 1
      %p221 = por %p219, %p220
      %p223 = scmp.ne.s32.totalorder %s206, %s222
      %p224 = scmp.eq.s32.totalorder %s25, 0
      %p225 = por %p223, %p224
      %p226 = scmp.le.s32.totalorder 1, %s19
      %p227 = scmp.lt.s32.totalorder %s19, 3
      %p228 = pnand %p226, %p227
      %p229 = pneg %p228
      // Predicated region
      $region9: #{tpu_custom_call.1} parent=5 // pred_check
        _
      $region10: #{tpu_custom_call.1} parent=5 // pred_check_branch
        %231 = sbr.rel (%p228) target = $region12
      $region11: #{tpu_custom_call.1} parent=5 // pred_region
        %s232 = ssub.s32 %s19, 1
        // Predicated region
        $region13: #{tpu_custom_call.1} parent=11 // pred_check
          %p233 = pneg %p66
        $region14: #{tpu_custom_call.1} parent=11 // pred_check_branch
          %235 = sbr.rel (%p233) target = $region16
        $region15: #{tpu_custom_call.1} parent=11 // pred_region
          _
        $region16: #{tpu_custom_call.1} parent=11 // pred_fallthru
          _
        // Predicated region
        $region17: #{tpu_custom_call.1} parent=11 // pred_check
          %p236 = pneg %p87
        $region18: #{tpu_custom_call.1} parent=11 // pred_check_branch
          %238 = sbr.rel (%p236) target = $region20
        $region19: #{tpu_custom_call.1} parent=11 // pred_region
          _
        $region20: #{tpu_custom_call.1} parent=11 // pred_fallthru
          _
        // Predicated region
        $region21: #{tpu_custom_call.1} parent=11 // pred_check
          %p239 = pneg %p108
        $region22: #{tpu_custom_call.1} parent=11 // pred_check_branch
          %241 = sbr.rel (%p239) target = $region24
        $region23: #{tpu_custom_call.1} parent=11 // pred_region
          %243 = vsyncadd [#allocation3], 0
          %s244 = sshll.u32 %s3, 4
          %s245 = int_to_ptr.hbm [resolvable:$true] %s244
          %s246 = sshll.u32 [#allocation2], 4
          %s247 = int_to_ptr.vmem [resolvable:$true] %s246
          %252 = dma.hbm_to_vmem [thread:$0]  %s245, 256, %s247, [#allocation3], 64, 64, 4
        $region24: #{tpu_custom_call.1} parent=11 // pred_fallthru
          _
        // Predicated region
        $region25: #{tpu_custom_call.1} parent=11 // pred_check
          %p253 = pneg %p129
        $region26: #{tpu_custom_call.1} parent=11 // pred_check_branch
          %255 = sbr.rel (%p253) target = $region28
        $region27: #{tpu_custom_call.1} parent=11 // pred_region
          %257 = vsyncadd [#allocation6], 0
          %s258 = sshll.u32 %s4, 4
          %s259 = int_to_ptr.hbm [resolvable:$true] %s258
          %s260 = sshll.u32 [#allocation5], 4
          %s261 = int_to_ptr.vmem [resolvable:$true] %s260
          %266 = dma.hbm_to_vmem [thread:$0]  %s259, 256, %s261, [#allocation6], 64, 64, 4
        $region28: #{tpu_custom_call.1} parent=11 // pred_fallthru
          _
        // Predicated region
        $region29: #{tpu_custom_call.1} parent=11 // pred_check
          %p267 = pneg %p150
        $region30: #{tpu_custom_call.1} parent=11 // pred_check_branch
          %269 = sbr.rel (%p267) target = $region32
        $region31: #{tpu_custom_call.1} parent=11 // pred_region
          _
        $region32: #{tpu_custom_call.1} parent=11 // pred_fallthru
          _
        // Predicated region
        $region33: #{tpu_custom_call.1} parent=11 // pred_check
          %p270 = pneg %p171
        $region34: #{tpu_custom_call.1} parent=11 // pred_check_branch
          %272 = sbr.rel (%p270) target = $region36
        $region35: #{tpu_custom_call.1} parent=11 // pred_region
          _
        $region36: #{tpu_custom_call.1} parent=11 // pred_fallthru
          _
        // Predicated region
        $region37: #{tpu_custom_call.1} parent=11 // pred_check
          %p273 = pneg %p192
        $region38: #{tpu_custom_call.1} parent=11 // pred_check_branch
          %275 = sbr.rel (%p273) target = $region40
        $region39: #{tpu_custom_call.1} parent=11 // pred_region
          %277 = vsyncadd [#allocation6], 0
          %s279 = sshll.u32 %s7, 4
          %s280 = int_to_ptr.hbm [resolvable:$true] %s279
          %s281 = sshll.u32 [#allocation7], 4
          %s282 = int_to_ptr.vmem [resolvable:$true] %s281
          %284 = dma.hbm_to_vmem [thread:$0]  %s280, 128, %s282, [#allocation6]
        $region40: #{tpu_custom_call.1} parent=11 // pred_fallthru
          _
      $region12: #{tpu_custom_call.1} parent=5 // pred_fallthru
        _
      %p285 = scmp.lt.s32.totalorder %s19, 2
      // Predicated region
      $region41: #{tpu_custom_call.1} parent=5 // pred_check
        %p286 = pneg %p285
      $region42: #{tpu_custom_call.1} parent=5 // pred_check_branch
        %288 = sbr.rel (%p286) target = $region44
      $region43: #{tpu_custom_call.1} parent=5 // pred_region
        // Predicated region
        $region45: #{tpu_custom_call.1} parent=43 // pred_check
          %p289 = pneg %p39
        $region46: #{tpu_custom_call.1} parent=43 // pred_check_branch
          %291 = sbr.rel (%p289) target = $region48
        $region47: #{tpu_custom_call.1} parent=43 // pred_region
          %s292 = smul.u32 2, %s19
          %p293 = scmp.lt.s32.totalorder %s292, 3
          %s294 = scalar_select %p293, %s292, 3
          %s295 = smul.addr %s294, 8
          %s296 = scalar_lea.vmem %s0, %s295
          %s297 = smul.u32 2, %s19
        $region48: #{tpu_custom_call.1} parent=43 // pred_fallthru
          _
      $region44: #{tpu_custom_call.1} parent=5 // pred_fallthru
        _
      %p298 = scmp.le.s32.totalorder 1, %s19
      %p299 = scmp.lt.s32.totalorder %s19, 3
      %p300 = pnand %p298, %p299
      %p301 = pneg %p300
      // Predicated region
      $region49: #{tpu_custom_call.1} parent=5 // pred_check
        _
      $region50: #{tpu_custom_call.1} parent=5 // pred_check_branch
        %303 = sbr.rel (%p300) target = $region52
      $region51: #{tpu_custom_call.1} parent=5 // pred_region
        %s304 = ssub.s32 %s19, 1
        // Predicated region
        $region53: #{tpu_custom_call.1} parent=51 // pred_check
          %p305 = pneg %p108
        $region54: #{tpu_custom_call.1} parent=51 // pred_check_branch
          %307 = sbr.rel (%p305) target = $region56
        $region55: #{tpu_custom_call.1} parent=51 // pred_region
          %309 = dma.done [#allocation3], 256
        $region56: #{tpu_custom_call.1} parent=51 // pred_fallthru
          _
        // Predicated region
        $region57: #{tpu_custom_call.1} parent=51 // pred_check
          %p310 = pneg %p129
        $region58: #{tpu_custom_call.1} parent=51 // pred_check_branch
          %312 = sbr.rel (%p310) target = $region60
        $region59: #{tpu_custom_call.1} parent=51 // pred_region
          %314 = dma.done [#allocation6], 256
        $region60: #{tpu_custom_call.1} parent=51 // pred_fallthru
          _
        // Predicated region
        $region61: #{tpu_custom_call.1} parent=51 // pred_check
          %p315 = pneg %p192
        $region62: #{tpu_custom_call.1} parent=51 // pred_check_branch
          %317 = sbr.rel (%p315) target = $region64
        $region63: #{tpu_custom_call.1} parent=51 // pred_region
          %319 = dma.done [#allocation6], 128
        $region64: #{tpu_custom_call.1} parent=51 // pred_fallthru
          _
        %s320 = smul.u32 2, %s24
        %p321 = scmp.lt.s32.totalorder %s320, 3
        %s322 = scalar_select %p321, %s320, 3
        %s323 = smul.addr %s322, 8
        %s324 = scalar_lea.vmem %s0, %s323
        %p325 = pneg %p45
        %p326 = pneg %p42
        %p327 = pneg %p66
        %p328 = pneg %p63
        %p329 = pneg %p87
        %p330 = pneg %p84
        %p331 = pneg %p108
        %p332 = pneg %p105
        %p333 = pneg %p129
        %p334 = pneg %p126
        %p335 = pneg %p150
        %p336 = pneg %p147
        %p337 = pneg %p171
        %p338 = pneg %p168
        %p339 = pneg %p192
        %p340 = pneg %p189
        %p341 = pneg %p218
        %p342 = pneg %p215
        %s343 = sand.u32 %s205, 1
        %s344 = scalar_lea.sflag [#allocation4], %s343
        %s345 = sand.u32 %s205, 1
        %s346 = smul.addr %s345, 16
        %s347 = scalar_lea.vmem [#allocation8], %s346
        %s348 = smul.u32 2, %s24
        %p349 = scmp.lt.s32.totalorder %s348, 3
        %s350 = scalar_select %p349, %s348, 3
        %s351 = smul.addr %s350, 8
        %s352 = scalar_lea.vmem %s0, %s351
        %s353 = smul.u32 2, %s24
        %s354 = smul.u32 2, %s24
        %v356 = vld [vmem:[%s352] sm:$0xff]
        %v357 = vld [vmem:[%s352 + $0x8] sm:$0xff]
        %v358 = vpack.c.bf16 %v357, %v356
        %v359 = vld [vmem:[#allocation7] sm:$0x3f]
        %v360 = vld [vmem:[%s1] sm:$0xf]
        %v361 = vld [vmem:[%s1 + $0x4] sm:$0xf]
        %v362 = vld [vmem:[%s1 + $0x8] sm:$0xf]
        %v363 = vld [vmem:[%s1 + $0xc] sm:$0xf]
        %v364 = vld [vmem:[%s2] sm:$0x1]
        %v366 = vperm.slane %v364, 0
        %v372 = vunpack.c.l.b16 %v360
        %v373 = vunpack.c.l.b16 %v361
        %v374 = vunpack.c.l.b16 %v362
        %v375 = vunpack.c.l.b16 %v363
        %v376 = vpack.c.b16 %v373, %v372
        %v377 = vpack.c.b16 %v375, %v374
        %vm380 = vcmask 261120
        %v382 = vsel %vm380, %v358, 0
        %384 = vmatpush.bf16.msra.mxu0 0
        %385 = vmatpush.bf16.msra.mxu0 0
        %386 = vmatpush.bf16.msra.mxu0 0
        %387 = vmatpush.bf16.msra.mxu0 0
        %388 = vmatpush.bf16.msra.mxu0 0
        %389 = vmatpush.bf16.msra.mxu0 0
        %390 = vmatpush.bf16.msra.mxu0 %v377
        %391 = vmatpush.bf16.msra.mxu0 %v376
        %392 = vmatmul.bf16.gmra.mxu0 %v382
        %v393 = vpop.f32.mrf.mxu0
        %v394 = vadd.f32 %v366, %v393
        %v395 = vpop.f32.mrf.mxu0
        %v396 = vadd.f32 %v366, %v395
        %397 = vdwg.mxu0
        %400 = vrot.lane.b32.xlu0 %v394, 120
        %v401 = vpop.permute.xlu0 %400
        %402 = vrot.lane.b32.xlu0 %v396, 120
        %v403 = vpop.permute.xlu0 %402
        %406 = vrot.lane.b32.xlu0 %v394, 112
        %v407 = vpop.permute.xlu0 %406
        %408 = vrot.lane.b32.xlu0 %v396, 112
        %v409 = vpop.permute.xlu0 %408
        %412 = vrot.lane.b32.xlu0 %v394, 104
        %v413 = vpop.permute.xlu0 %412
        %414 = vrot.lane.b32.xlu0 %v396, 104
        %v415 = vpop.permute.xlu0 %414
        %v418 = vpack.c.bf16 %v394, %v394
        %v419 = vpack.c.bf16 %v396, %v396
        %v420 = vpack.c.bf16 %v401, %v401
        %v421 = vpack.c.bf16 %v403, %v403
        %v422 = vpack.c.bf16 %v407, %v407
        %v423 = vpack.c.bf16 %v409, %v409
        %v424 = vpack.c.bf16 %v413, %v413
        %v425 = vpack.c.bf16 %v415, %v415
        %v427 = vunpack.c.l.b16 %v418
        %v428 = vpack.c.b16 %v427, %v427
        %429 = vrot.lane.b32.xlu0 %v428, 96
        %v430 = vpop.permute.xlu0 %429
        %vm431 = vcmask 64512
        %v433 = vsel %vm431, %v418, 0
        %v436 = vsel %vm431, %v430, 0
        %438 = vmatpush.bf16.xpose.msra.mxu0 0
        %439 = vmatpush.bf16.xpose.msra.mxu0 0
        %440 = vmatpush.bf16.xpose.msra.mxu0 0
        %441 = vmatpush.bf16.xpose.msra.mxu0 0
        %442 = vmatpush.bf16.xpose.msra.mxu0 0
        %443 = vmatpush.bf16.xpose.msra.mxu0 0
        %444 = vmatpush.bf16.xpose.msra.mxu0 0
        %445 = vmatpush.bf16.xpose.msra.mxu0 %v436
        %446 = vmatmul.bf16.gmra.mxu0 %v433
        %v447 = vpop.f32.mrf.mxu0
        %v448 = vadd.f32 0.0, %v447
        %v449 = vpop.f32.mrf.mxu0
        %450 = vdwg.mxu0
        %v452 = vunpack.c.l.b16 %v419
        %v453 = vpack.c.b16 %v452, %v452
        %454 = vrot.lane.b32.xlu0 %v453, 96
        %v455 = vpop.permute.xlu0 %454
        %v457 = vsel %vm431, %v419, 0
        %v460 = vsel %vm431, %v455, 0
        %462 = vmatpush.bf16.xpose.msra.mxu0 0
        %463 = vmatpush.bf16.xpose.msra.mxu0 0
        %464 = vmatpush.bf16.xpose.msra.mxu0 0
        %465 = vmatpush.bf16.xpose.msra.mxu0 0
        %466 = vmatpush.bf16.xpose.msra.mxu0 0
        %467 = vmatpush.bf16.xpose.msra.mxu0 0
        %468 = vmatpush.bf16.xpose.msra.mxu0 0
        %469 = vmatpush.bf16.xpose.msra.mxu0 %v460
        %470 = vmatmul.bf16.gmra.mxu0 %v457
        %v471 = vpop.f32.mrf.mxu0
        %v472 = vadd.f32 0.0, %v471
        %v473 = vpop.f32.mrf.mxu0
        %474 = vdwg.mxu0
        %v476 = vunpack.c.l.b16 %v420
        %v477 = vpack.c.b16 %v476, %v476
        %478 = vrot.lane.b32.xlu0 %v477, 96
        %v479 = vpop.permute.xlu0 %478
        %v481 = vsel %vm431, %v420, 0
        %v484 = vsel %vm431, %v479, 0
        %486 = vmatpush.bf16.xpose.msra.mxu0 0
        %487 = vmatpush.bf16.xpose.msra.mxu0 0
        %488 = vmatpush.bf16.xpose.msra.mxu0 0
        %489 = vmatpush.bf16.xpose.msra.mxu0 0
        %490 = vmatpush.bf16.xpose.msra.mxu0 0
        %491 = vmatpush.bf16.xpose.msra.mxu0 0
        %492 = vmatpush.bf16.xpose.msra.mxu0 0
        %493 = vmatpush.bf16.xpose.msra.mxu0 %v484
        %494 = vmatmul.bf16.gmra.mxu0 %v481
        %v495 = vpop.f32.mrf.mxu0
        %v496 = vadd.f32 0.0, %v495
        %v497 = vpop.f32.mrf.mxu0
        %498 = vdwg.mxu0
        %v500 = vunpack.c.l.b16 %v421
        %v501 = vpack.c.b16 %v500, %v500
        %502 = vrot.lane.b32.xlu0 %v501, 96
        %v503 = vpop.permute.xlu0 %502
        %v505 = vsel %vm431, %v421, 0
        %v508 = vsel %vm431, %v503, 0
        %510 = vmatpush.bf16.xpose.msra.mxu0 0
        %511 = vmatpush.bf16.xpose.msra.mxu0 0
        %512 = vmatpush.bf16.xpose.msra.mxu0 0
        %513 = vmatpush.bf16.xpose.msra.mxu0 0
        %514 = vmatpush.bf16.xpose.msra.mxu0 0
        %515 = vmatpush.bf16.xpose.msra.mxu0 0
        %516 = vmatpush.bf16.xpose.msra.mxu0 0
        %517 = vmatpush.bf16.xpose.msra.mxu0 %v508
        %518 = vmatmul.bf16.gmra.mxu0 %v505
        %v519 = vpop.f32.mrf.mxu0
        %v520 = vadd.f32 0.0, %v519
        %v521 = vpop.f32.mrf.mxu0
        %522 = vdwg.mxu0
        %v524 = vunpack.c.l.b16 %v422
        %v525 = vpack.c.b16 %v524, %v524
        %526 = vrot.lane.b32.xlu0 %v525, 96
        %v527 = vpop.permute.xlu0 %526
        %v529 = vsel %vm431, %v422, 0
        %v532 = vsel %vm431, %v527, 0
        %534 = vmatpush.bf16.xpose.msra.mxu0 0
        %535 = vmatpush.bf16.xpose.msra.mxu0 0
        %536 = vmatpush.bf16.xpose.msra.mxu0 0
        %537 = vmatpush.bf16.xpose.msra.mxu0 0
        %538 = vmatpush.bf16.xpose.msra.mxu0 0
        %539 = vmatpush.bf16.xpose.msra.mxu0 0
        %540 = vmatpush.bf16.xpose.msra.mxu0 0
        %541 = vmatpush.bf16.xpose.msra.mxu0 %v532
        %542 = vmatmul.bf16.gmra.mxu0 %v529
        %v543 = vpop.f32.mrf.mxu0
        %v544 = vadd.f32 0.0, %v543
        %v545 = vpop.f32.mrf.mxu0
        %546 = vdwg.mxu0
        %v548 = vunpack.c.l.b16 %v423
        %v549 = vpack.c.b16 %v548, %v548
        %550 = vrot.lane.b32.xlu0 %v549, 96
        %v551 = vpop.permute.xlu0 %550
        %v553 = vsel %vm431, %v423, 0
        %v556 = vsel %vm431, %v551, 0
        %558 = vmatpush.bf16.xpose.msra.mxu0 0
        %559 = vmatpush.bf16.xpose.msra.mxu0 0
        %560 = vmatpush.bf16.xpose.msra.mxu0 0
        %561 = vmatpush.bf16.xpose.msra.mxu0 0
        %562 = vmatpush.bf16.xpose.msra.mxu0 0
        %563 = vmatpush.bf16.xpose.msra.mxu0 0
        %564 = vmatpush.bf16.xpose.msra.mxu0 0
        %565 = vmatpush.bf16.xpose.msra.mxu0 %v556
        %566 = vmatmul.bf16.gmra.mxu0 %v553
        %v567 = vpop.f32.mrf.mxu0
        %v568 = vadd.f32 0.0, %v567
        %v569 = vpop.f32.mrf.mxu0
        %570 = vdwg.mxu0
        %v572 = vunpack.c.l.b16 %v424
        %v573 = vpack.c.b16 %v572, %v572
        %574 = vrot.lane.b32.xlu0 %v573, 96
        %v575 = vpop.permute.xlu0 %574
        %v577 = vsel %vm431, %v424, 0
        %v580 = vsel %vm431, %v575, 0
        %582 = vmatpush.bf16.xpose.msra.mxu0 0
        %583 = vmatpush.bf16.xpose.msra.mxu0 0
        %584 = vmatpush.bf16.xpose.msra.mxu0 0
        %585 = vmatpush.bf16.xpose.msra.mxu0 0
        %586 = vmatpush.bf16.xpose.msra.mxu0 0
        %587 = vmatpush.bf16.xpose.msra.mxu0 0
        %588 = vmatpush.bf16.xpose.msra.mxu0 0
        %589 = vmatpush.bf16.xpose.msra.mxu0 %v580
        %590 = vmatmul.bf16.gmra.mxu0 %v577
        %v591 = vpop.f32.mrf.mxu0
        %v592 = vadd.f32 0.0, %v591
        %v593 = vpop.f32.mrf.mxu0
        %594 = vdwg.mxu0
        %v596 = vunpack.c.l.b16 %v425
        %v597 = vpack.c.b16 %v596, %v596
        %598 = vrot.lane.b32.xlu0 %v597, 96
        %v599 = vpop.permute.xlu0 %598
        %v601 = vsel %vm431, %v425, 0
        %v604 = vsel %vm431, %v599, 0
        %606 = vmatpush.bf16.xpose.msra.mxu0 0
        %607 = vmatpush.bf16.xpose.msra.mxu0 0
        %608 = vmatpush.bf16.xpose.msra.mxu0 0
        %609 = vmatpush.bf16.xpose.msra.mxu0 0
        %610 = vmatpush.bf16.xpose.msra.mxu0 0
        %611 = vmatpush.bf16.xpose.msra.mxu0 0
        %612 = vmatpush.bf16.xpose.msra.mxu0 0
        %613 = vmatpush.bf16.xpose.msra.mxu0 %v604
        %614 = vmatmul.bf16.gmra.mxu0 %v601
        %v615 = vpop.f32.mrf.mxu0
        %v616 = vadd.f32 0.0, %v615
        %v617 = vpop.f32.mrf.mxu0
        %618 = vdwg.mxu0
        %v619 = vsel %vm431, %v448, -inf
        %620 = vmax.xlane.f32.xlu0 %v619
        %v621 = vpop.xlane.xlu0 %620
        %v622 = vsel %vm431, %v472, -inf
        %623 = vmax.xlane.f32.xlu0 %v622
        %v624 = vpop.xlane.xlu0 %623
        %v625 = vsel %vm431, %v496, -inf
        %626 = vmax.xlane.f32.xlu0 %v625
        %v627 = vpop.xlane.xlu0 %626
        %v628 = vsel %vm431, %v520, -inf
        %629 = vmax.xlane.f32.xlu0 %v628
        %v630 = vpop.xlane.xlu0 %629
        %v631 = vsel %vm431, %v544, -inf
        %632 = vmax.xlane.f32.xlu0 %v631
        %v633 = vpop.xlane.xlu0 %632
        %v634 = vsel %vm431, %v568, -inf
        %635 = vmax.xlane.f32.xlu0 %v634
        %v636 = vpop.xlane.xlu0 %635
        %v637 = vsel %vm431, %v592, -inf
        %638 = vmax.xlane.f32.xlu0 %v637
        %v639 = vpop.xlane.xlu0 %638
        %v640 = vsel %vm431, %v616, -inf
        %641 = vmax.xlane.f32.xlu0 %v640
        %v642 = vpop.xlane.xlu0 %641
        %v643 = vsub.f32 %v448, %v621
        %v644 = vsub.f32 %v472, %v624
        %v645 = vsub.f32 %v496, %v627
        %v646 = vsub.f32 %v520, %v630
        %v647 = vsub.f32 %v544, %v633
        %v648 = vsub.f32 %v568, %v636
        %v649 = vsub.f32 %v592, %v639
        %v650 = vsub.f32 %v616, %v642
        %v651 = vmul.f32 %v643, 1.442695
        %v652 = vpow.pop %v651
        %v653 = vmul.f32 %v644, 1.442695
        %v654 = vpow.pop %v653
        %v655 = vmul.f32 %v645, 1.442695
        %v656 = vpow.pop %v655
        %v657 = vmul.f32 %v646, 1.442695
        %v658 = vpow.pop %v657
        %v659 = vmul.f32 %v647, 1.442695
        %v660 = vpow.pop %v659
        %v661 = vmul.f32 %v648, 1.442695
        %v662 = vpow.pop %v661
        %v663 = vmul.f32 %v649, 1.442695
        %v664 = vpow.pop %v663
        %v665 = vmul.f32 %v650, 1.442695
        %v666 = vpow.pop %v665
        %v667 = vsel %vm431, %v652, 0.0
        %668 = vadd.xlane.f32.xlu0 %v667
        %v669 = vpop.xlane.xlu0 %668
        %v670 = vsel %vm431, %v654, 0.0
        %671 = vadd.xlane.f32.xlu0 %v670
        %v672 = vpop.xlane.xlu0 %671
        %v673 = vsel %vm431, %v656, 0.0
        %674 = vadd.xlane.f32.xlu0 %v673
        %v675 = vpop.xlane.xlu0 %674
        %v676 = vsel %vm431, %v658, 0.0
        %677 = vadd.xlane.f32.xlu0 %v676
        %v678 = vpop.xlane.xlu0 %677
        %v679 = vsel %vm431, %v660, 0.0
        %680 = vadd.xlane.f32.xlu0 %v679
        %v681 = vpop.xlane.xlu0 %680
        %v682 = vsel %vm431, %v662, 0.0
        %683 = vadd.xlane.f32.xlu0 %v682
        %v684 = vpop.xlane.xlu0 %683
        %v685 = vsel %vm431, %v664, 0.0
        %686 = vadd.xlane.f32.xlu0 %v685
        %v687 = vpop.xlane.xlu0 %686
        %v688 = vsel %vm431, %v666, 0.0
        %689 = vadd.xlane.f32.xlu0 %v688
        %v690 = vpop.xlane.xlu0 %689
        %v691 = vrcp.pop %v669
        %v692 = vrcp.pop %v672
        %v693 = vrcp.pop %v675
        %v694 = vrcp.pop %v678
        %v695 = vrcp.pop %v681
        %v696 = vrcp.pop %v684
        %v697 = vrcp.pop %v687
        %v698 = vrcp.pop %v690
        %v699 = vmul.f32 %v652, %v691
        %v700 = vmul.f32 %v654, %v692
        %v701 = vmul.f32 %v656, %v693
        %v702 = vmul.f32 %v658, %v694
        %v703 = vmul.f32 %v660, %v695
        %v704 = vmul.f32 %v662, %v696
        %v705 = vmul.f32 %v664, %v697
        %v706 = vmul.f32 %v666, %v698
        %v707 = vpack.c.bf16 %v699, %v699
        %v708 = vpack.c.bf16 %v700, %v700
        %v709 = vpack.c.bf16 %v701, %v701
        %v710 = vpack.c.bf16 %v702, %v702
        %v711 = vpack.c.bf16 %v703, %v703
        %v712 = vpack.c.bf16 %v704, %v704
        %v713 = vpack.c.bf16 %v705, %v705
        %v714 = vpack.c.bf16 %v706, %v706
        %715 = vrot.lane.b32.xlu0 %v428, 64
        %v716 = vpop.permute.xlu0 %715
        %v718 = vsel %vm431, %v707, 0
        %vm720 = vcmask 1043456
        %v722 = vsel %vm720, %v716, 0
        %724 = vmatpush.bf16.msra.mxu0 0
        %725 = vmatpush.bf16.msra.mxu0 0
        %726 = vmatpush.bf16.msra.mxu0 0
        %727 = vmatpush.bf16.msra.mxu0 0
        %728 = vmatpush.bf16.msra.mxu0 0
        %729 = vmatpush.bf16.msra.mxu0 0
        %730 = vmatpush.bf16.msra.mxu0 0
        %731 = vmatpush.bf16.msra.mxu0 %v722
        %732 = vmatmul.bf16.gmra.mxu0 %v718
        %v733 = vpop.f32.mrf.mxu0
        %v734 = vadd.f32 0.0, %v733
        %v735 = vpop.f32.mrf.mxu0
        %736 = vdwg.mxu0
        %737 = vrot.lane.b32.xlu0 %v453, 64
        %v738 = vpop.permute.xlu0 %737
        %v740 = vsel %vm431, %v708, 0
        %v743 = vsel %vm720, %v738, 0
        %745 = vmatpush.bf16.msra.mxu0 0
        %746 = vmatpush.bf16.msra.mxu0 0
        %747 = vmatpush.bf16.msra.mxu0 0
        %748 = vmatpush.bf16.msra.mxu0 0
        %749 = vmatpush.bf16.msra.mxu0 0
        %750 = vmatpush.bf16.msra.mxu0 0
        %751 = vmatpush.bf16.msra.mxu0 0
        %752 = vmatpush.bf16.msra.mxu0 %v743
        %753 = vmatmul.bf16.gmra.mxu0 %v740
        %v754 = vpop.f32.mrf.mxu0
        %v755 = vadd.f32 0.0, %v754
        %v756 = vpop.f32.mrf.mxu0
        %757 = vdwg.mxu0
        %758 = vrot.lane.b32.xlu0 %v477, 64
        %v759 = vpop.permute.xlu0 %758
        %v761 = vsel %vm431, %v709, 0
        %v764 = vsel %vm720, %v759, 0
        %766 = vmatpush.bf16.msra.mxu0 0
        %767 = vmatpush.bf16.msra.mxu0 0
        %768 = vmatpush.bf16.msra.mxu0 0
        %769 = vmatpush.bf16.msra.mxu0 0
        %770 = vmatpush.bf16.msra.mxu0 0
        %771 = vmatpush.bf16.msra.mxu0 0
        %772 = vmatpush.bf16.msra.mxu0 0
        %773 = vmatpush.bf16.msra.mxu0 %v764
        %774 = vmatmul.bf16.gmra.mxu0 %v761
        %v775 = vpop.f32.mrf.mxu0
        %v776 = vadd.f32 0.0, %v775
        %v777 = vpop.f32.mrf.mxu0
        %778 = vdwg.mxu0
        %779 = vrot.lane.b32.xlu0 %v501, 64
        %v780 = vpop.permute.xlu0 %779
        %v782 = vsel %vm431, %v710, 0
        %v785 = vsel %vm720, %v780, 0
        %787 = vmatpush.bf16.msra.mxu0 0
        %788 = vmatpush.bf16.msra.mxu0 0
        %789 = vmatpush.bf16.msra.mxu0 0
        %790 = vmatpush.bf16.msra.mxu0 0
        %791 = vmatpush.bf16.msra.mxu0 0
        %792 = vmatpush.bf16.msra.mxu0 0
        %793 = vmatpush.bf16.msra.mxu0 0
        %794 = vmatpush.bf16.msra.mxu0 %v785
        %795 = vmatmul.bf16.gmra.mxu0 %v782
        %v796 = vpop.f32.mrf.mxu0
        %v797 = vadd.f32 0.0, %v796
        %v798 = vpop.f32.mrf.mxu0
        %799 = vdwg.mxu0
        %800 = vrot.lane.b32.xlu0 %v525, 64
        %v801 = vpop.permute.xlu0 %800
        %v803 = vsel %vm431, %v711, 0
        %v806 = vsel %vm720, %v801, 0
        %808 = vmatpush.bf16.msra.mxu0 0
        %809 = vmatpush.bf16.msra.mxu0 0
        %810 = vmatpush.bf16.msra.mxu0 0
        %811 = vmatpush.bf16.msra.mxu0 0
        %812 = vmatpush.bf16.msra.mxu0 0
        %813 = vmatpush.bf16.msra.mxu0 0
        %814 = vmatpush.bf16.msra.mxu0 0
        %815 = vmatpush.bf16.msra.mxu0 %v806
        %816 = vmatmul.bf16.gmra.mxu0 %v803
        %v817 = vpop.f32.mrf.mxu0
        %v818 = vadd.f32 0.0, %v817
        %v819 = vpop.f32.mrf.mxu0
        %820 = vdwg.mxu0
        %821 = vrot.lane.b32.xlu0 %v549, 64
        %v822 = vpop.permute.xlu0 %821
        %v824 = vsel %vm431, %v712, 0
        %v827 = vsel %vm720, %v822, 0
        %829 = vmatpush.bf16.msra.mxu0 0
        %830 = vmatpush.bf16.msra.mxu0 0
        %831 = vmatpush.bf16.msra.mxu0 0
        %832 = vmatpush.bf16.msra.mxu0 0
        %833 = vmatpush.bf16.msra.mxu0 0
        %834 = vmatpush.bf16.msra.mxu0 0
        %835 = vmatpush.bf16.msra.mxu0 0
        %836 = vmatpush.bf16.msra.mxu0 %v827
        %837 = vmatmul.bf16.gmra.mxu0 %v824
        %v838 = vpop.f32.mrf.mxu0
        %v839 = vadd.f32 0.0, %v838
        %v840 = vpop.f32.mrf.mxu0
        %841 = vdwg.mxu0
        %842 = vrot.lane.b32.xlu0 %v573, 64
        %v843 = vpop.permute.xlu0 %842
        %v845 = vsel %vm431, %v713, 0
        %v848 = vsel %vm720, %v843, 0
        %850 = vmatpush.bf16.msra.mxu0 0
        %851 = vmatpush.bf16.msra.mxu0 0
        %852 = vmatpush.bf16.msra.mxu0 0
        %853 = vmatpush.bf16.msra.mxu0 0
        %854 = vmatpush.bf16.msra.mxu0 0
        %855 = vmatpush.bf16.msra.mxu0 0
        %856 = vmatpush.bf16.msra.mxu0 0
        %857 = vmatpush.bf16.msra.mxu0 %v848
        %858 = vmatmul.bf16.gmra.mxu0 %v845
        %v859 = vpop.f32.mrf.mxu0
        %v860 = vadd.f32 0.0, %v859
        %v861 = vpop.f32.mrf.mxu0
        %862 = vdwg.mxu0
        %863 = vrot.lane.b32.xlu0 %v597, 64
        %v864 = vpop.permute.xlu0 %863
        %v866 = vsel %vm431, %v714, 0
        %v869 = vsel %vm720, %v864, 0
        %871 = vmatpush.bf16.msra.mxu0 0
        %872 = vmatpush.bf16.msra.mxu0 0
        %873 = vmatpush.bf16.msra.mxu0 0
        %874 = vmatpush.bf16.msra.mxu0 0
        %875 = vmatpush.bf16.msra.mxu0 0
        %876 = vmatpush.bf16.msra.mxu0 0
        %877 = vmatpush.bf16.msra.mxu0 0
        %878 = vmatpush.bf16.msra.mxu0 %v869
        %879 = vmatmul.bf16.gmra.mxu0 %v866
        %v880 = vpop.f32.mrf.mxu0
        %v881 = vadd.f32 0.0, %v880
        %v882 = vpop.f32.mrf.mxu0
        %883 = vdwg.mxu0
        %v884 = vpack.c.bf16 %v755, %v734
        %v885 = vld [vmem:[#allocation2] sm:$0xf]
        %v886 = vpack.c.bf16 %v797, %v776
        %s887 = scalar_lea.vmem [#allocation2], 4
        %v888 = vld [vmem:[%s887] sm:$0xf]
        %v890 = vsel %vm431, %v886, 0
        %v893 = vsel %vm720, %v888, 0
        %895 = vmatpush.bf16.msra.mxu0 0
        %896 = vmatpush.bf16.msra.mxu0 0
        %897 = vmatpush.bf16.msra.mxu0 0
        %898 = vmatpush.bf16.msra.mxu0 0
        %899 = vmatpush.bf16.msra.mxu0 0
        %900 = vmatpush.bf16.msra.mxu0 0
        %901 = vmatpush.bf16.msra.mxu0 0
        %902 = vmatpush.bf16.msra.mxu0 %v893
        %903 = vmatmul.bf16.gmra.mxu0 %v890
        %v904 = vpop.f32.mrf.mxu0
        %v905 = vadd.f32 0.0, %v904
        %v906 = vpop.f32.mrf.mxu0
        %v907 = vadd.f32 0.0, %v906
        %908 = vdwg.mxu0
        %v910 = vsel %vm431, %v884, 0
        %v913 = vsel %vm720, %v885, 0
        %915 = vmatpush.bf16.msra.mxu0 0
        %916 = vmatpush.bf16.msra.mxu0 0
        %917 = vmatpush.bf16.msra.mxu0 0
        %918 = vmatpush.bf16.msra.mxu0 0
        %919 = vmatpush.bf16.msra.mxu0 0
        %920 = vmatpush.bf16.msra.mxu0 0
        %921 = vmatpush.bf16.msra.mxu0 0
        %922 = vmatpush.bf16.msra.mxu0 %v913
        %923 = vmatmul.bf16.gmra.mxu0 %v910
        %v924 = vpop.f32.mrf.mxu0
        %v925 = vadd.f32 %v905, %v924
        %v926 = vpop.f32.mrf.mxu0
        %v927 = vadd.f32 %v907, %v926
        %928 = vdwg.mxu0
        %v929 = vpack.c.bf16 %v839, %v818
        %s930 = scalar_lea.vmem [#allocation2], 8
        %v931 = vld [vmem:[%s930] sm:$0xf]
        %v933 = vsel %vm431, %v929, 0
        %v936 = vsel %vm720, %v931, 0
        %938 = vmatpush.bf16.msra.mxu0 0
        %939 = vmatpush.bf16.msra.mxu0 0
        %940 = vmatpush.bf16.msra.mxu0 0
        %941 = vmatpush.bf16.msra.mxu0 0
        %942 = vmatpush.bf16.msra.mxu0 0
        %943 = vmatpush.bf16.msra.mxu0 0
        %944 = vmatpush.bf16.msra.mxu0 0
        %945 = vmatpush.bf16.msra.mxu0 %v936
        %946 = vmatmul.bf16.gmra.mxu0 %v933
        %v947 = vpop.f32.mrf.mxu0
        %v948 = vadd.f32 0.0, %v947
        %v949 = vpop.f32.mrf.mxu0
        %v950 = vadd.f32 0.0, %v949
        %951 = vdwg.mxu0
        %v952 = vadd.f32 %v925, %v948
        %v953 = vadd.f32 %v927, %v950
        %v954 = vpack.c.bf16 %v881, %v860
        %s955 = scalar_lea.vmem [#allocation2], 12
        %v956 = vld [vmem:[%s955] sm:$0xf]
        %v958 = vsel %vm431, %v954, 0
        %v961 = vsel %vm720, %v956, 0
        %963 = vmatpush.bf16.msra.mxu0 0
        %964 = vmatpush.bf16.msra.mxu0 0
        %965 = vmatpush.bf16.msra.mxu0 0
        %966 = vmatpush.bf16.msra.mxu0 0
        %967 = vmatpush.bf16.msra.mxu0 0
        %968 = vmatpush.bf16.msra.mxu0 0
        %969 = vmatpush.bf16.msra.mxu0 0
        %970 = vmatpush.bf16.msra.mxu0 %v961
        %971 = vmatmul.bf16.gmra.mxu0 %v958
        %v972 = vpop.f32.mrf.mxu0
        %v973 = vadd.f32 0.0, %v972
        %v974 = vpop.f32.mrf.mxu0
        %v975 = vadd.f32 0.0, %v974
        %976 = vdwg.mxu0
        %v977 = vadd.f32 %v952, %v973
        %v978 = vadd.f32 %v953, %v975
        %v979 = vperm.slane %v359, 0
        %v980 = vadd.f32 %v977, %v979
        %v981 = vadd.f32 %v978, %v979
        %v982 = vadd.f32 %v980, %v356
        %v983 = vadd.f32 %v981, %v357
        %v984 = vsel %vm380, %v982, 0.0
        %985 = vadd.xlane.f32.xlu0 %v984
        %v986 = vpop.xlane.xlu0 %985
        %v987 = vsel %vm380, %v983, 0.0
        %988 = vadd.xlane.f32.xlu0 %v987
        %v989 = vpop.xlane.xlu0 %988
        %v990 = vrcp.pop 32.0
        %v991 = vmul.f32 32.0, %v990
        %v992 = vsub.f32 1.0, %v991
        %v993 = vmul.f32 %v990, %v992
        %v994 = vadd.f32 %v990, %v993
        %vm995 = vweird.f32 %v990
        %v996 = vsel %vm995, %v990, %v994
        %v997 = vmul.f32 %v986, %v996
        %v998 = vmul.f32 %v989, %v996
        %v999 = vsub.f32 %v982, %v997
        %v1000 = vsub.f32 %v983, %v998
        %v1001 = vmul.f32 %v999, %v999
        %v1002 = vmul.f32 %v1000, %v1000
        %v1003 = vsel %vm380, %v1001, 0.0
        %1004 = vadd.xlane.f32.xlu0 %v1003
        %v1005 = vpop.xlane.xlu0 %1004
        %v1006 = vsel %vm380, %v1002, 0.0
        %1007 = vadd.xlane.f32.xlu0 %v1006
        %v1008 = vpop.xlane.xlu0 %1007
        %v1009 = vmul.f32 %v1005, %v996
        %v1010 = vmul.f32 %v1008, %v996
        %v1011 = vadd.f32 %v1009, 1e-05
        %v1012 = vadd.f32 %v1010, 1e-05
        %v1013 = vrsqrt.pop %v1011
        %v1014 = vmul.f32 %v1013, %v1011
        %v1015 = vmul.f32 %v1014, %v1013
        %v1016 = vmul.f32 0.5, %v1015
        %v1017 = vsub.f32 1.5, %v1016
        %v1018 = vmul.f32 %v1013, %v1017
        %vm1019 = vweird.f32 %v1011
        %vm1020 = vweird.f32 %v1013
        %vm1021 = vmor %vm1019, %vm1020
        %v1022 = vsel %vm1021, %v1013, %v1018
        %v1023 = vrsqrt.pop %v1012
        %v1024 = vmul.f32 %v1023, %v1012
        %v1025 = vmul.f32 %v1024, %v1023
        %v1026 = vmul.f32 0.5, %v1025
        %v1027 = vsub.f32 1.5, %v1026
        %v1028 = vmul.f32 %v1023, %v1027
        %vm1029 = vweird.f32 %v1012
        %vm1030 = vweird.f32 %v1023
        %vm1031 = vmor %vm1029, %vm1030
        %v1032 = vsel %vm1031, %v1023, %v1028
        %v1033 = vmul.f32 %v999, %v1022
        %v1034 = vmul.f32 %v1000, %v1032
        %v1035 = vperm.slane %v359, 1
        %v1036 = vmul.f32 %v1033, %v1035
        %v1037 = vmul.f32 %v1034, %v1035
        %v1038 = vperm.slane %v359, 2
        %v1039 = vadd.f32 %v1036, %v1038
        %v1040 = vadd.f32 %v1037, %v1038
        %v1041 = vpack.c.bf16 %v1040, %v1039
        %v1042 = vld [vmem:[#allocation5] sm:$0xf]
        %v1043 = vld [vmem:[#allocation5 + $0x4] sm:$0xf]
        %v1044 = vld [vmem:[#allocation5 + $0x8] sm:$0xf]
        %v1045 = vld [vmem:[#allocation5 + $0xc] sm:$0xf]
        %v1046 = vld [vmem:[%s5] sm:$0x1]
        %v1048 = vperm.slane %v1046, 0
        %v1054 = vunpack.c.l.b16 %v1042
        %v1055 = vunpack.c.l.b16 %v1043
        %v1056 = vunpack.c.l.b16 %v1044
        %v1057 = vunpack.c.l.b16 %v1045
        %v1058 = vpack.c.b16 %v1055, %v1054
        %v1059 = vpack.c.b16 %v1057, %v1056
        %v1063 = vsel %vm380, %v1041, 0
        %1065 = vmatpush.bf16.msra.mxu0 0
        %1066 = vmatpush.bf16.msra.mxu0 0
        %1067 = vmatpush.bf16.msra.mxu0 0
        %1068 = vmatpush.bf16.msra.mxu0 0
        %1069 = vmatpush.bf16.msra.mxu0 0
        %1070 = vmatpush.bf16.msra.mxu0 0
        %1071 = vmatpush.bf16.msra.mxu0 %v1059
        %1072 = vmatpush.bf16.msra.mxu0 %v1058
        %1073 = vmatmul.bf16.gmra.mxu0 %v1063
        %v1074 = vpop.f32.mrf.mxu0
        %v1075 = vadd.f32 %v1048, %v1074
        %v1076 = vpop.f32.mrf.mxu0
        %v1077 = vadd.f32 %v1048, %v1076
        %1078 = vdwg.mxu0
        %v1079 = vmax.f32 %v1075, 0.0
        %v1080 = vmax.f32 %v1077, 0.0
        %v1081 = vpack.c.bf16 %v1080, %v1079
        %v1082 = vld [vmem:[%s6] sm:$0xf]
        %v1083 = vld [vmem:[%s6 + $0x4] sm:$0xf]
        %v1084 = vld [vmem:[%s6 + $0x8] sm:$0xf]
        %v1085 = vld [vmem:[%s6 + $0xc] sm:$0xf]
        %v1086 = vld [vmem:[%s6 + $0x10] sm:$0xf]
        %v1087 = vld [vmem:[%s6 + $0x14] sm:$0xf]
        %v1088 = vld [vmem:[%s6 + $0x18] sm:$0xf]
        %v1089 = vld [vmem:[%s6 + $0x1c] sm:$0xf]
        %v1090 = vperm.slane %v359, 3
        %v1099 = vunpack.c.l.b16 %v1082
        %v1100 = vunpack.c.l.b16 %v1083
        %v1101 = vunpack.c.l.b16 %v1084
        %v1102 = vunpack.c.l.b16 %v1085
        %v1103 = vunpack.c.l.b16 %v1086
        %v1104 = vunpack.c.l.b16 %v1087
        %v1105 = vunpack.c.l.b16 %v1088
        %v1106 = vunpack.c.l.b16 %v1089
        %v1107 = vpack.c.b16 %v1100, %v1099
        %v1108 = vpack.c.b16 %v1102, %v1101
        %v1109 = vpack.c.b16 %v1104, %v1103
        %v1110 = vpack.c.b16 %v1106, %v1105
        %vm1115 = vcmask 523264
        %v1117 = vsel %vm1115, %v1081, 0
        %1119 = vmatpush.bf16.msra.mxu0 0
        %1120 = vmatpush.bf16.msra.mxu0 0
        %1121 = vmatpush.bf16.msra.mxu0 0
        %1122 = vmatpush.bf16.msra.mxu0 0
        %1123 = vmatpush.bf16.msra.mxu0 %v1110
        %1124 = vmatpush.bf16.msra.mxu0 %v1109
        %1125 = vmatpush.bf16.msra.mxu0 %v1108
        %1126 = vmatpush.bf16.msra.mxu0 %v1107
        %1127 = vmatmul.bf16.gmra.mxu0 %v1117
        %v1128 = vpop.f32.mrf.mxu0
        %v1129 = vadd.f32 %v1090, %v1128
        %v1130 = vpop.f32.mrf.mxu0
        %v1131 = vadd.f32 %v1090, %v1130
        %1132 = vdwg.mxu0
        %v1133 = vadd.f32 %v1129, %v1039
        %v1134 = vadd.f32 %v1131, %v1040
        %v1135 = vsel %vm380, %v1133, 0.0
        %1136 = vadd.xlane.f32.xlu0 %v1135
        %v1137 = vpop.xlane.xlu0 %1136
        %v1138 = vsel %vm380, %v1134, 0.0
        %1139 = vadd.xlane.f32.xlu0 %v1138
        %v1140 = vpop.xlane.xlu0 %1139
        %v1141 = vmul.f32 %v1137, %v996
        %v1142 = vmul.f32 %v1140, %v996
        %v1143 = vsub.f32 %v1133, %v1141
        %v1144 = vsub.f32 %v1134, %v1142
        %v1145 = vmul.f32 %v1143, %v1143
        %v1146 = vmul.f32 %v1144, %v1144
        %v1147 = vsel %vm380, %v1145, 0.0
        %1148 = vadd.xlane.f32.xlu0 %v1147
        %v1149 = vpop.xlane.xlu0 %1148
        %v1150 = vsel %vm380, %v1146, 0.0
        %1151 = vadd.xlane.f32.xlu0 %v1150
        %v1152 = vpop.xlane.xlu0 %1151
        %v1153 = vmul.f32 %v1149, %v996
        %v1154 = vmul.f32 %v1152, %v996
        %v1155 = vadd.f32 %v1153, 1e-05
        %v1156 = vadd.f32 %v1154, 1e-05
        %v1157 = vrsqrt.pop %v1155
        %v1158 = vmul.f32 %v1157, %v1155
        %v1159 = vmul.f32 %v1158, %v1157
        %v1160 = vmul.f32 0.5, %v1159
        %v1161 = vsub.f32 1.5, %v1160
        %v1162 = vmul.f32 %v1157, %v1161
        %vm1163 = vweird.f32 %v1155
        %vm1164 = vweird.f32 %v1157
        %vm1165 = vmor %vm1163, %vm1164
        %v1166 = vsel %vm1165, %v1157, %v1162
        %v1167 = vrsqrt.pop %v1156
        %v1168 = vmul.f32 %v1167, %v1156
        %v1169 = vmul.f32 %v1168, %v1167
        %v1170 = vmul.f32 0.5, %v1169
        %v1171 = vsub.f32 1.5, %v1170
        %v1172 = vmul.f32 %v1167, %v1171
        %vm1173 = vweird.f32 %v1156
        %vm1174 = vweird.f32 %v1167
        %vm1175 = vmor %vm1173, %vm1174
        %v1176 = vsel %vm1175, %v1167, %v1172
        %v1177 = vmul.f32 %v1143, %v1166
        %v1178 = vmul.f32 %v1144, %v1176
        %v1179 = vperm.slane %v359, 4
        %v1180 = vmul.f32 %v1177, %v1179
        %v1181 = vmul.f32 %v1178, %v1179
        %v1182 = vperm.slane %v359, 5
        %v1183 = vadd.f32 %v1180, %v1182
        %v1184 = vadd.f32 %v1181, %v1182
        %1185 = vst.msk [vmem:[%s347] sm:$0xff] %vm380, %v1183
        %1186 = vst.msk [vmem:[%s347 + $0x8] sm:$0xff] %vm380, %v1184
        %s1187 = sand.u32 %s205, 1
        %s1188 = scalar_lea.sflag [#allocation4], %s1187
        %s1189 = sand.u32 %s205, 1
        %s1190 = smul.addr %s1189, 16
        %s1191 = scalar_lea.vmem [#allocation8], %s1190
        // Predicated region
        $region65: #{tpu_custom_call.1} parent=51 // pred_check
          %p1192 = pneg %p215
        $region66: #{tpu_custom_call.1} parent=51 // pred_check_branch
          %1194 = sbr.rel (%p1192) target = $region68
        $region67: #{tpu_custom_call.1} parent=51 // pred_region
          %s1195 = smul.u32 2, %s24
          %1197 = vsyncadd %s1188, 0
          %s1198 = smul.addr %s1195, 8
          %s1199 = scalar_lea.hbm %s8, %s1198
          %s1200 = sshll.u32 %s1191, 4
          %s1201 = int_to_ptr.vmem [resolvable:$true] %s1200
          %s1202 = sshll.u32 %s1199, 4
          %s1203 = int_to_ptr.hbm [resolvable:$true] %s1202
          %1208 = dma.vmem_to_hbm [thread:$0]  %s1201, 256, %s1203, %s1188, 128, 128, 8
        $region68: #{tpu_custom_call.1} parent=51 // pred_fallthru
          _
      $region52: #{tpu_custom_call.1} parent=5 // pred_fallthru
        _
      %p1209 = scmp.le.s32.totalorder 2, %s19
      // Predicated region
      $region69: #{tpu_custom_call.1} parent=5 // pred_check
        %p1210 = pneg %p1209
      $region70: #{tpu_custom_call.1} parent=5 // pred_check_branch
        %1212 = sbr.rel (%p1210) target = $region72
      $region71: #{tpu_custom_call.1} parent=5 // pred_region
        %s1213 = ssub.s32 %s19, 2
        // Predicated region
        $region73: #{tpu_custom_call.1} parent=71 // pred_check
          %p1214 = pneg %p221
        $region74: #{tpu_custom_call.1} parent=71 // pred_check_branch
          %1216 = sbr.rel (%p1214) target = $region76
        $region75: #{tpu_custom_call.1} parent=71 // pred_region
          %s1217 = sand.u32 %s206, 1
          %s1218 = scalar_lea.sflag [#allocation4], %s1217
          %s1219 = sand.u32 %s206, 1
          %s1220 = smul.addr %s1219, 16
          %s1221 = scalar_lea.vmem [#allocation8], %s1220
          %1223 = dma.done %s1218, 256
        $region76: #{tpu_custom_call.1} parent=71 // pred_fallthru
          _
      $region72: #{tpu_custom_call.1} parent=5 // pred_fallthru
        _
    $region6: #{tpu_custom_call.1} parent=1 // loop_footer
      %s23 = sadd.s32 1, %s19
    $region7: #{tpu_custom_call.1} parent=1 // loop_footer_branch
      %18 = sbr.rel target = $region3
    $region8: #{tpu_custom_call.1} parent=1 // loop_exit
      _
    %1224 = vsyncpa [#allocation3], 1
    %s1225 = scalar_lea.sflag [#allocation3], 1
    %1226 = vsyncpa %s1225, 1
    %1227 = vsyncpa [#allocation6], 1
    %1228 = vsyncpa [#allocation4], 1
    %s1229 = scalar_lea.sflag [#allocation4], 1
    %1230 = vsyncpa %s1229, 1

</llo_original>
